<compile_context>
chip_gen: v7x
topology: tpu7x:2x2x1
jax: 0.10.0
libtpu: 0.0.40
codegen_flags: <defaults>
</compile_context>

<pallas_src>
import functools

import jax
import jax.numpy as jnp
from jax.experimental import pallas as pl
from jax.experimental.pallas import tpu as pltpu


# ------------------------------ Pallas kernel --------------------------------
def _mynet1_kernel(batch,
                   x_ref, w1_ref, b1_ref, w2_ref, b2_ref, w3_ref, b3_ref,
                   w45_ref, b45_ref, out_ref,
                   s1_ref, xcat2_ref, s2_ref, xcat3_ref, s3_ref):
    """Entire MyNet1 forward; all weights/activations live in VMEM."""
    f32 = jnp.float32
    bf16 = jnp.bfloat16

    # ---- conv1: one MXU matmul on the wrapper-side im2col'd input ----------
    # x_ref: (B*63, 8), w1_ref: (8, 50)
    h1 = jnp.dot(x_ref[...], w1_ref[...], preferred_element_type=f32)
    s1_ref[...] = jnp.maximum(h1 + b1_ref[...], 0.0)          # (B*63, 50)

    # ---- conv2: gather taps via strided VMEM reads, fuse taps along K ------
    # xcat2[b*20 + l, j*50 + c] = s1[b*63 + l*3 + j, c]
    for b in range(batch):                                     # tiny static loops
        for j in range(6):
            xcat2_ref[pl.ds(b * 20, 20), pl.ds(j * 50, 50)] = \
                s1_ref[pl.ds(b * 63 + j, 20, stride=3), :]
    h2 = jnp.dot(xcat2_ref[...].astype(bf16), w2_ref[...],
                 preferred_element_type=f32)                   # (B*20, 100)
    s2_ref[...] = jnp.maximum(h2 + b2_ref[...], 0.0)

    # ---- conv3: same trick ---------------------------------------------------
    # xcat3[b*9 + l, j*100 + c] = s2[b*20 + l*2 + j, c]
    for b in range(batch):
        for j in range(4):
            xcat3_ref[pl.ds(b * 9, 9), pl.ds(j * 100, 100)] = \
                s2_ref[pl.ds(b * 20 + j, 9, stride=2), :]
    h3 = jnp.dot(xcat3_ref[...].astype(bf16), w3_ref[...],
                 preferred_element_type=f32)                   # (B*9, 200)
    s3_ref[...] = jnp.maximum(h3 + b3_ref[...], 0.0)

    # ---- folded mlp1+mlp2 as a VPU contraction (no tiny MXU dots) ----------
    # out[b, o] = sum_{l,c} act3[b, l, c] * w45[o, l, c] + b45[o]
    rows = []
    for b in range(batch):
        a = s3_ref[pl.ds(b * 9, 9), :]                                  # (9, 200)
        r0 = jnp.sum(a * w45_ref[0], axis=-1, keepdims=True)           # (9, 1)
        r1 = jnp.sum(a * w45_ref[1], axis=-1, keepdims=True)           # (9, 1)
        r = jnp.concatenate([r0, r1], axis=-1)                         # (9, 2)
        rows.append(jnp.sum(r, axis=0, keepdims=True))                 # (1, 2)
    out_ref[...] = jnp.concatenate(rows, axis=0) + b45_ref[...]        # one store


# --------------------------- parameter preparation ---------------------------
def init_params(key):
    """Deterministic PyTorch-like uniform init (scale = 1/sqrt(fan_in))."""
    def uniform(k, shape, fan_in):
        bound = 1.0 / jnp.sqrt(fan_in)
        return jax.random.uniform(k, shape, jnp.float32, -bound, bound)

    ks = jax.random.split(key, 10)
    p = {}
    p["w1"] = uniform(ks[0], (50, 1, 8), 1 * 8)
    p["b1"] = uniform(ks[1], (50,), 1 * 8)
    p["w2"] = uniform(ks[2], (100, 50, 6), 50 * 6)
    p["b2"] = uniform(ks[3], (100,), 50 * 6)
    p["w3"] = uniform(ks[4], (200, 100, 4), 100 * 4)
    p["b3"] = uniform(ks[5], (200,), 100 * 4)
    p["w4"] = uniform(ks[6], (4, 9 * 200), 9 * 200)
    p["b4"] = uniform(ks[7], (4,), 9 * 200)
    p["w5"] = uniform(ks[8], (2, 4), 4)
    p["b5"] = uniform(ks[9], (2,), 4)
    return p


def prepare_params(params):
    """One-time re-layout of the weights into the exact form the kernel eats."""
    f32 = jnp.float32
    bf16 = jnp.bfloat16
    # Exact fold of the two back-to-back linears (no nonlinearity in between).
    w45 = params["w4"].astype(f32).T @ params["w5"].astype(f32).T       # (1800, 2)
    b45 = params["b4"].astype(f32) @ params["w5"].astype(f32).T \
        + params["b5"].astype(f32)                                      # (2,)
    return {
        # conv1 weight as (K*Cin, Cout) = (8, 50)
        "w1": jnp.transpose(params["w1"].astype(f32), (2, 1, 0)).reshape(8, 50),
        "b1": params["b1"].astype(f32).reshape(1, -1),
        # conv2/conv3 weights: tap-major concat along K -> (K*Cin, Cout), bf16.
        "w2": jnp.transpose(params["w2"].astype(f32), (2, 1, 0))
              .reshape(6 * 50, 100).astype(bf16),                        # (300, 100)
        "b2": params["b2"].astype(f32).reshape(1, -1),
        "w3": jnp.transpose(params["w3"].astype(f32), (2, 1, 0))
              .reshape(4 * 100, 200).astype(bf16),                       # (400, 200)
        "b3": params["b3"].astype(f32).reshape(1, -1),
        # torch .view(B,-1) on (B,200,9) flattens as c*9+l; kernel act layout is
        # (l, c), so permute folded W45 to (o, l, c).
        "w45": jnp.transpose(w45.reshape(200, 9, 2), (2, 1, 0)),          # (2, 9, 200)
        "b45": b45.reshape(1, 2),
    }


# --------------------------------- forward -----------------------------------
@jax.jit
def mynet1_forward(prepared, x):
    """x: (B, 1, 256) float32 -> (B, 2) float32 — one fused Pallas kernel."""
    batch, c_in, length = x.shape
    assert c_in == 1 and length == 256, (c_in, length)
    # conv1 im2col in the wrapper: trivial XLA gather, only B*63*8*4 bytes.
    idx = jnp.arange(63)[:, None] * 4 + jnp.arange(8)[None, :]          # (63, 8)
    x_col = x[:, 0, :][:, idx].reshape(batch * 63, 8).astype(jnp.float32)

    operands = (
        x_col,
        prepared["w1"], prepared["b1"],
        prepared["w2"], prepared["b2"],
        prepared["w3"], prepared["b3"],
        prepared["w45"], prepared["b45"],
    )
    flops = batch * (
        2 * 63 * 8 * 50          # conv1
        + 2 * 20 * 300 * 100     # conv2 (taps fused along K)
        + 2 * 9 * 400 * 200      # conv3
        + 4 * 9 * 200 * 2)       # folded linear (VPU)
    bytes_accessed = sum(int(o.size) * o.dtype.itemsize for o in operands) \
        + batch * 2 * 4

    return pl.pallas_call(
        functools.partial(_mynet1_kernel, batch),
        out_shape=jax.ShapeDtypeStruct((batch, 2), jnp.float32),
        in_specs=[pl.BlockSpec(memory_space=pltpu.MemorySpace.VMEM)] * len(operands),
        out_specs=pl.BlockSpec(memory_space=pltpu.MemorySpace.VMEM),
        scratch_shapes=[
            pltpu.VMEM((batch * 63, 50), jnp.float32),    # conv1 output
            pltpu.VMEM((batch * 20, 300), jnp.float32),   # conv2 fused input
            pltpu.VMEM((batch * 20, 100), jnp.float32),   # conv2 output
            pltpu.VMEM((batch * 9, 400), jnp.float32),    # conv3 fused input
            pltpu.VMEM((batch * 9, 200), jnp.float32),    # conv3 output
        ],
        cost_estimate=pl.CostEstimate(flops=flops, transcendentals=0,
                                      bytes_accessed=bytes_accessed),
    )(*operands)


# --------------------------- pure-JAX reference ------------------------------
def _reference_forward(params, x):
    hi = jax.lax.Precision.HIGHEST

    def conv1d_relu(x, w, b, stride):
        _, _, L = x.shape
        _, _, K = w.shape
        L_out = (L - K) // stride + 1
        idx = jnp.arange(L_out)[:, None] * stride + jnp.arange(K)[None, :]
        patches = x[:, :, idx]                                  # (B, Cin, Lout, K)
        out = jnp.einsum("bclk,ock->bol", patches, w, precision=hi) \
            + b[None, :, None]
        return jax.nn.relu(out)

    x = conv1d_relu(x, params["w1"], params["b1"], 4)           # (B, 50, 63)
    x = conv1d_relu(x, params["w2"], params["b2"], 3)           # (B, 100, 20)
    x = conv1d_relu(x, params["w3"], params["b3"], 2)           # (B, 200, 9)
    x = x.reshape(x.shape[0], -1)                               # torch .view order
    x = jnp.dot(x, params["w4"].T, precision=hi) + params["b4"]
    x = jnp.dot(x, params["w5"].T, precision=hi) + params["b5"]
    return x


if __name__ == "__main__":
    key = jax.random.PRNGKey(0)
    pkey, xkey = jax.random.split(key)
    params = init_params(pkey)
    prepared = prepare_params(params)           # one-time weight re-layout
    x = jax.random.normal(xkey, (2, 1, 256), dtype=jnp.float32)

    out = mynet1_forward(prepared, x)
    jax.block_until_ready(out)
    assert out.shape == (2, 2) and out.dtype == jnp.float32

    ref = _reference_forward(params, x)
    # bf16 conv2/conv3 weights + activations (f32 accumulation) -> loose-ish tol.
    assert jnp.allclose(out, ref, rtol=2e-2, atol=5e-3), (out, ref)
    print("KERNEL_OK")
</pallas_src>

<mosaic_0001>
module attributes {stable_mosaic.version = 11 : i64} {
  func.func @_mynet1_kernel(%arg0: memref<126x8xf32, #tpu.memory_space<vmem>>, %arg1: memref<8x50xf32, #tpu.memory_space<vmem>>, %arg2: memref<1x50xf32, #tpu.memory_space<vmem>>, %arg3: memref<300x100xbf16, #tpu.memory_space<vmem>>, %arg4: memref<1x100xf32, #tpu.memory_space<vmem>>, %arg5: memref<400x200xbf16, #tpu.memory_space<vmem>>, %arg6: memref<1x200xf32, #tpu.memory_space<vmem>>, %arg7: memref<2x9x200xf32, #tpu.memory_space<vmem>>, %arg8: memref<1x2xf32, #tpu.memory_space<vmem>>, %arg9: memref<2x2xf32, #tpu.memory_space<vmem>>, %arg10: memref<126x50xf32, #tpu.memory_space<vmem>>, %arg11: memref<40x300xf32, #tpu.memory_space<vmem>>, %arg12: memref<40x100xf32, #tpu.memory_space<vmem>>, %arg13: memref<18x400xf32, #tpu.memory_space<vmem>>, %arg14: memref<18x200xf32, #tpu.memory_space<vmem>>) attributes {dimension_semantics = [], scalar_prefetch = 0 : i64, scratch_operands = 5 : i64, tpu.core_type = #tpu.core_type<tc>} {
    %c0 = arith.constant 0 : index
    %c0_0 = arith.constant 0 : index
    %0 = vector.load %arg0[%c0, %c0_0] : memref<126x8xf32, #tpu.memory_space<vmem>>, vector<126x8xf32>
    %c0_1 = arith.constant 0 : index
    %c0_2 = arith.constant 0 : index
    %1 = vector.load %arg1[%c0_1, %c0_2] : memref<8x50xf32, #tpu.memory_space<vmem>>, vector<8x50xf32>
    %cst = arith.constant dense<0.000000e+00> : vector<126x50xf32>
    %2 = tpu.matmul %0, %1, %cst {dimension_numbers = #tpu.dot_dimension_numbers<[1], [0], [0], [1], [0, 0, 1, 1], [], []>} : vector<126x8xf32>, vector<8x50xf32>, vector<126x50xf32> -> vector<126x50xf32>
    %c0_3 = arith.constant 0 : index
    %c0_4 = arith.constant 0 : index
    %3 = vector.load %arg2[%c0_3, %c0_4] : memref<1x50xf32, #tpu.memory_space<vmem>>, vector<1x50xf32>
    %4 = vector.broadcast %3 : vector<1x50xf32> to vector<126x50xf32>
    %5 = arith.addf %2, %4 : vector<126x50xf32>
    %cst_5 = arith.constant 0.000000e+00 : f32
    %6 = vector.broadcast %cst_5 : f32 to vector<126x50xf32>
    %7 = arith.maximumf %5, %6 : vector<126x50xf32>
    %c0_6 = arith.constant 0 : index
    %c0_7 = arith.constant 0 : index
    %8 = vector.load %arg10[%c0_6, %c0_7] : memref<126x50xf32, #tpu.memory_space<vmem>>, vector<126x50xf32>
    tpu.vector_store %arg10[%c0_6, %c0_7], %7 {strides = array<i32>} : memref<126x50xf32, #tpu.memory_space<vmem>>, vector<126x50xf32>,
    %c0_8 = arith.constant 0 : index
    %c0_9 = arith.constant 0 : index
    %9 = tpu.strided_load %arg10[%c0_8, %c0_9] {strides = array<i32: 3, 1>} : memref<126x50xf32, #tpu.memory_space<vmem>>, vector<20x50xf32>
    %c0_10 = arith.constant 0 : index
    %c0_11 = arith.constant 0 : index
    %10 = vector.load %arg11[%c0_10, %c0_11] : memref<40x300xf32, #tpu.memory_space<vmem>>, vector<20x50xf32>
    tpu.vector_store %arg11[%c0_10, %c0_11], %9 {strides = array<i32>} : memref<40x300xf32, #tpu.memory_space<vmem>>, vector<20x50xf32>,
    %c1 = arith.constant 1 : index
    %c0_12 = arith.constant 0 : index
    %11 = tpu.strided_load %arg10[%c1, %c0_12] {strides = array<i32: 3, 1>} : memref<126x50xf32, #tpu.memory_space<vmem>>, vector<20x50xf32>
    %c0_13 = arith.constant 0 : index
    %c50 = arith.constant 50 : index
    %12 = vector.load %arg11[%c0_13, %c50] : memref<40x300xf32, #tpu.memory_space<vmem>>, vector<20x50xf32>
    tpu.vector_store %arg11[%c0_13, %c50], %11 {strides = array<i32>} : memref<40x300xf32, #tpu.memory_space<vmem>>, vector<20x50xf32>,
    %c2 = arith.constant 2 : index
    %c0_14 = arith.constant 0 : index
    %13 = tpu.strided_load %arg10[%c2, %c0_14] {strides = array<i32: 3, 1>} : memref<126x50xf32, #tpu.memory_space<vmem>>, vector<20x50xf32>
    %c0_15 = arith.constant 0 : index
    %c100 = arith.constant 100 : index
    %14 = vector.load %arg11[%c0_15, %c100] : memref<40x300xf32, #tpu.memory_space<vmem>>, vector<20x50xf32>
    tpu.vector_store %arg11[%c0_15, %c100], %13 {strides = array<i32>} : memref<40x300xf32, #tpu.memory_space<vmem>>, vector<20x50xf32>,
    %c3 = arith.constant 3 : index
    %c0_16 = arith.constant 0 : index
    %15 = tpu.strided_load %arg10[%c3, %c0_16] {strides = array<i32: 3, 1>} : memref<126x50xf32, #tpu.memory_space<vmem>>, vector<20x50xf32>
    %c0_17 = arith.constant 0 : index
    %c150 = arith.constant 150 : index
    %16 = vector.load %arg11[%c0_17, %c150] : memref<40x300xf32, #tpu.memory_space<vmem>>, vector<20x50xf32>
    tpu.vector_store %arg11[%c0_17, %c150], %15 {strides = array<i32>} : memref<40x300xf32, #tpu.memory_space<vmem>>, vector<20x50xf32>,
    %c4 = arith.constant 4 : index
    %c0_18 = arith.constant 0 : index
    %17 = tpu.strided_load %arg10[%c4, %c0_18] {strides = array<i32: 3, 1>} : memref<126x50xf32, #tpu.memory_space<vmem>>, vector<20x50xf32>
    %c0_19 = arith.constant 0 : index
    %c200 = arith.constant 200 : index
    %18 = vector.load %arg11[%c0_19, %c200] : memref<40x300xf32, #tpu.memory_space<vmem>>, vector<20x50xf32>
    tpu.vector_store %arg11[%c0_19, %c200], %17 {strides = array<i32>} : memref<40x300xf32, #tpu.memory_space<vmem>>, vector<20x50xf32>,
    %c5 = arith.constant 5 : index
    %c0_20 = arith.constant 0 : index
    %19 = tpu.strided_load %arg10[%c5, %c0_20] {strides = array<i32: 3, 1>} : memref<126x50xf32, #tpu.memory_space<vmem>>, vector<20x50xf32>
    %c0_21 = arith.constant 0 : index
    %c250 = arith.constant 250 : index
    %20 = vector.load %arg11[%c0_21, %c250] : memref<40x300xf32, #tpu.memory_space<vmem>>, vector<20x50xf32>
    tpu.vector_store %arg11[%c0_21, %c250], %19 {strides = array<i32>} : memref<40x300xf32, #tpu.memory_space<vmem>>, vector<20x50xf32>,
    %c63 = arith.constant 63 : index
    %c0_22 = arith.constant 0 : index
    %21 = tpu.strided_load %arg10[%c63, %c0_22] {strides = array<i32: 3, 1>} : memref<126x50xf32, #tpu.memory_space<vmem>>, vector<20x50xf32>
    %c20 = arith.constant 20 : index
    %c0_23 = arith.constant 0 : index
    %22 = vector.load %arg11[%c20, %c0_23] : memref<40x300xf32, #tpu.memory_space<vmem>>, vector<20x50xf32>
    tpu.vector_store %arg11[%c20, %c0_23], %21 {strides = array<i32>} : memref<40x300xf32, #tpu.memory_space<vmem>>, vector<20x50xf32>,
    %c64 = arith.constant 64 : index
    %c0_24 = arith.constant 0 : index
    %23 = tpu.strided_load %arg10[%c64, %c0_24] {strides = array<i32: 3, 1>} : memref<126x50xf32, #tpu.memory_space<vmem>>, vector<20x50xf32>
    %c20_25 = arith.constant 20 : index
    %c50_26 = arith.constant 50 : index
    %24 = vector.load %arg11[%c20_25, %c50_26] : memref<40x300xf32, #tpu.memory_space<vmem>>, vector<20x50xf32>
    tpu.vector_store %arg11[%c20_25, %c50_26], %23 {strides = array<i32>} : memref<40x300xf32, #tpu.memory_space<vmem>>, vector<20x50xf32>,
    %c65 = arith.constant 65 : index
    %c0_27 = arith.constant 0 : index
    %25 = tpu.strided_load %arg10[%c65, %c0_27] {strides = array<i32: 3, 1>} : memref<126x50xf32, #tpu.memory_space<vmem>>, vector<20x50xf32>
    %c20_28 = arith.constant 20 : index
    %c100_29 = arith.constant 100 : index
    %26 = vector.load %arg11[%c20_28, %c100_29] : memref<40x300xf32, #tpu.memory_space<vmem>>, vector<20x50xf32>
    tpu.vector_store %arg11[%c20_28, %c100_29], %25 {strides = array<i32>} : memref<40x300xf32, #tpu.memory_space<vmem>>, vector<20x50xf32>,
    %c66 = arith.constant 66 : index
    %c0_30 = arith.constant 0 : index
    %27 = tpu.strided_load %arg10[%c66, %c0_30] {strides = array<i32: 3, 1>} : memref<126x50xf32, #tpu.memory_space<vmem>>, vector<20x50xf32>
    %c20_31 = arith.constant 20 : index
    %c150_32 = arith.constant 150 : index
    %28 = vector.load %arg11[%c20_31, %c150_32] : memref<40x300xf32, #tpu.memory_space<vmem>>, vector<20x50xf32>
    tpu.vector_store %arg11[%c20_31, %c150_32], %27 {strides = array<i32>} : memref<40x300xf32, #tpu.memory_space<vmem>>, vector<20x50xf32>,
    %c67 = arith.constant 67 : index
    %c0_33 = arith.constant 0 : index
    %29 = tpu.strided_load %arg10[%c67, %c0_33] {strides = array<i32: 3, 1>} : memref<126x50xf32, #tpu.memory_space<vmem>>, vector<20x50xf32>
    %c20_34 = arith.constant 20 : index
    %c200_35 = arith.constant 200 : index
    %30 = vector.load %arg11[%c20_34, %c200_35] : memref<40x300xf32, #tpu.memory_space<vmem>>, vector<20x50xf32>
    tpu.vector_store %arg11[%c20_34, %c200_35], %29 {strides = array<i32>} : memref<40x300xf32, #tpu.memory_space<vmem>>, vector<20x50xf32>,
    %c68 = arith.constant 68 : index
    %c0_36 = arith.constant 0 : index
    %31 = tpu.strided_load %arg10[%c68, %c0_36] {strides = array<i32: 3, 1>} : memref<126x50xf32, #tpu.memory_space<vmem>>, vector<20x50xf32>
    %c20_37 = arith.constant 20 : index
    %c250_38 = arith.constant 250 : index
    %32 = vector.load %arg11[%c20_37, %c250_38] : memref<40x300xf32, #tpu.memory_space<vmem>>, vector<20x50xf32>
    tpu.vector_store %arg11[%c20_37, %c250_38], %31 {strides = array<i32>} : memref<40x300xf32, #tpu.memory_space<vmem>>, vector<20x50xf32>,
    %c0_39 = arith.constant 0 : index
    %c0_40 = arith.constant 0 : index
    %33 = vector.load %arg11[%c0_39, %c0_40] : memref<40x300xf32, #tpu.memory_space<vmem>>, vector<40x300xf32>
    %34 = arith.truncf %33 : vector<40x300xf32> to vector<40x300xbf16>
    %c0_41 = arith.constant 0 : index
    %c0_42 = arith.constant 0 : index
    %35 = vector.load %arg3[%c0_41, %c0_42] : memref<300x100xbf16, #tpu.memory_space<vmem>>, vector<300x100xbf16>
    %cst_43 = arith.constant dense<0.000000e+00> : vector<40x100xf32>
    %36 = tpu.matmul %34, %35, %cst_43 {dimension_numbers = #tpu.dot_dimension_numbers<[1], [0], [0], [1], [0, 0, 1, 1], [], []>} : vector<40x300xbf16>, vector<300x100xbf16>, vector<40x100xf32> -> vector<40x100xf32>
    %c0_44 = arith.constant 0 : index
    %c0_45 = arith.constant 0 : index
    %37 = vector.load %arg4[%c0_44, %c0_45] : memref<1x100xf32, #tpu.memory_space<vmem>>, vector<1x100xf32>
    %38 = vector.broadcast %37 : vector<1x100xf32> to vector<40x100xf32>
    %39 = arith.addf %36, %38 : vector<40x100xf32>
    %cst_46 = arith.constant 0.000000e+00 : f32
    %40 = vector.broadcast %cst_46 : f32 to vector<40x100xf32>
    %41 = arith.maximumf %39, %40 : vector<40x100xf32>
    %c0_47 = arith.constant 0 : index
    %c0_48 = arith.constant 0 : index
    %42 = vector.load %arg12[%c0_47, %c0_48] : memref<40x100xf32, #tpu.memory_space<vmem>>, vector<40x100xf32>
    tpu.vector_store %arg12[%c0_47, %c0_48], %41 {strides = array<i32>} : memref<40x100xf32, #tpu.memory_space<vmem>>, vector<40x100xf32>,
    %c0_49 = arith.constant 0 : index
    %c0_50 = arith.constant 0 : index
    %43 = tpu.strided_load %arg12[%c0_49, %c0_50] {strides = array<i32: 2, 1>} : memref<40x100xf32, #tpu.memory_space<vmem>>, vector<9x100xf32>
    %c0_51 = arith.constant 0 : index
    %c0_52 = arith.constant 0 : index
    %44 = vector.load %arg13[%c0_51, %c0_52] : memref<18x400xf32, #tpu.memory_space<vmem>>, vector<9x100xf32>
    tpu.vector_store %arg13[%c0_51, %c0_52], %43 {strides = array<i32>} : memref<18x400xf32, #tpu.memory_space<vmem>>, vector<9x100xf32>,
    %c1_53 = arith.constant 1 : index
    %c0_54 = arith.constant 0 : index
    %45 = tpu.strided_load %arg12[%c1_53, %c0_54] {strides = array<i32: 2, 1>} : memref<40x100xf32, #tpu.memory_space<vmem>>, vector<9x100xf32>
    %c0_55 = arith.constant 0 : index
    %c100_56 = arith.constant 100 : index
    %46 = vector.load %arg13[%c0_55, %c100_56] : memref<18x400xf32, #tpu.memory_space<vmem>>, vector<9x100xf32>
    tpu.vector_store %arg13[%c0_55, %c100_56], %45 {strides = array<i32>} : memref<18x400xf32, #tpu.memory_space<vmem>>, vector<9x100xf32>,
    %c2_57 = arith.constant 2 : index
    %c0_58 = arith.constant 0 : index
    %47 = tpu.strided_load %arg12[%c2_57, %c0_58] {strides = array<i32: 2, 1>} : memref<40x100xf32, #tpu.memory_space<vmem>>, vector<9x100xf32>
    %c0_59 = arith.constant 0 : index
    %c200_60 = arith.constant 200 : index
    %48 = vector.load %arg13[%c0_59, %c200_60] : memref<18x400xf32, #tpu.memory_space<vmem>>, vector<9x100xf32>
    tpu.vector_store %arg13[%c0_59, %c200_60], %47 {strides = array<i32>} : memref<18x400xf32, #tpu.memory_space<vmem>>, vector<9x100xf32>,
    %c3_61 = arith.constant 3 : index
    %c0_62 = arith.constant 0 : index
    %49 = tpu.strided_load %arg12[%c3_61, %c0_62] {strides = array<i32: 2, 1>} : memref<40x100xf32, #tpu.memory_space<vmem>>, vector<9x100xf32>
    %c0_63 = arith.constant 0 : index
    %c300 = arith.constant 300 : index
    %50 = vector.load %arg13[%c0_63, %c300] : memref<18x400xf32, #tpu.memory_space<vmem>>, vector<9x100xf32>
    tpu.vector_store %arg13[%c0_63, %c300], %49 {strides = array<i32>} : memref<18x400xf32, #tpu.memory_space<vmem>>, vector<9x100xf32>,
    %c20_64 = arith.constant 20 : index
    %c0_65 = arith.constant 0 : index
    %51 = tpu.strided_load %arg12[%c20_64, %c0_65] {strides = array<i32: 2, 1>} : memref<40x100xf32, #tpu.memory_space<vmem>>, vector<9x100xf32>
    %c9 = arith.constant 9 : index
    %c0_66 = arith.constant 0 : index
    %52 = vector.load %arg13[%c9, %c0_66] : memref<18x400xf32, #tpu.memory_space<vmem>>, vector<9x100xf32>
    tpu.vector_store %arg13[%c9, %c0_66], %51 {strides = array<i32>} : memref<18x400xf32, #tpu.memory_space<vmem>>, vector<9x100xf32>,
    %c21 = arith.constant 21 : index
    %c0_67 = arith.constant 0 : index
    %53 = tpu.strided_load %arg12[%c21, %c0_67] {strides = array<i32: 2, 1>} : memref<40x100xf32, #tpu.memory_space<vmem>>, vector<9x100xf32>
    %c9_68 = arith.constant 9 : index
    %c100_69 = arith.constant 100 : index
    %54 = vector.load %arg13[%c9_68, %c100_69] : memref<18x400xf32, #tpu.memory_space<vmem>>, vector<9x100xf32>
    tpu.vector_store %arg13[%c9_68, %c100_69], %53 {strides = array<i32>} : memref<18x400xf32, #tpu.memory_space<vmem>>, vector<9x100xf32>,
    %c22 = arith.constant 22 : index
    %c0_70 = arith.constant 0 : index
    %55 = tpu.strided_load %arg12[%c22, %c0_70] {strides = array<i32: 2, 1>} : memref<40x100xf32, #tpu.memory_space<vmem>>, vector<9x100xf32>
    %c9_71 = arith.constant 9 : index
    %c200_72 = arith.constant 200 : index
    %56 = vector.load %arg13[%c9_71, %c200_72] : memref<18x400xf32, #tpu.memory_space<vmem>>, vector<9x100xf32>
    tpu.vector_store %arg13[%c9_71, %c200_72], %55 {strides = array<i32>} : memref<18x400xf32, #tpu.memory_space<vmem>>, vector<9x100xf32>,
    %c23 = arith.constant 23 : index
    %c0_73 = arith.constant 0 : index
    %57 = tpu.strided_load %arg12[%c23, %c0_73] {strides = array<i32: 2, 1>} : memref<40x100xf32, #tpu.memory_space<vmem>>, vector<9x100xf32>
    %c9_74 = arith.constant 9 : index
    %c300_75 = arith.constant 300 : index
    %58 = vector.load %arg13[%c9_74, %c300_75] : memref<18x400xf32, #tpu.memory_space<vmem>>, vector<9x100xf32>
    tpu.vector_store %arg13[%c9_74, %c300_75], %57 {strides = array<i32>} : memref<18x400xf32, #tpu.memory_space<vmem>>, vector<9x100xf32>,
    %c0_76 = arith.constant 0 : index
    %c0_77 = arith.constant 0 : index
    %59 = vector.load %arg13[%c0_76, %c0_77] : memref<18x400xf32, #tpu.memory_space<vmem>>, vector<18x400xf32>
    %60 = arith.truncf %59 : vector<18x400xf32> to vector<18x400xbf16>
    %c0_78 = arith.constant 0 : index
    %c0_79 = arith.constant 0 : index
    %61 = vector.load %arg5[%c0_78, %c0_79] : memref<400x200xbf16, #tpu.memory_space<vmem>>, vector<400x200xbf16>
    %cst_80 = arith.constant dense<0.000000e+00> : vector<18x200xf32>
    %62 = tpu.matmul %60, %61, %cst_80 {dimension_numbers = #tpu.dot_dimension_numbers<[1], [0], [0], [1], [0, 0, 1, 1], [], []>} : vector<18x400xbf16>, vector<400x200xbf16>, vector<18x200xf32> -> vector<18x200xf32>
    %c0_81 = arith.constant 0 : index
    %c0_82 = arith.constant 0 : index
    %63 = vector.load %arg6[%c0_81, %c0_82] : memref<1x200xf32, #tpu.memory_space<vmem>>, vector<1x200xf32>
    %64 = vector.broadcast %63 : vector<1x200xf32> to vector<18x200xf32>
    %65 = arith.addf %62, %64 : vector<18x200xf32>
    %cst_83 = arith.constant 0.000000e+00 : f32
    %66 = vector.broadcast %cst_83 : f32 to vector<18x200xf32>
    %67 = arith.maximumf %65, %66 : vector<18x200xf32>
    %c0_84 = arith.constant 0 : index
    %c0_85 = arith.constant 0 : index
    %68 = vector.load %arg14[%c0_84, %c0_85] : memref<18x200xf32, #tpu.memory_space<vmem>>, vector<18x200xf32>
    tpu.vector_store %arg14[%c0_84, %c0_85], %67 {strides = array<i32>} : memref<18x200xf32, #tpu.memory_space<vmem>>, vector<18x200xf32>,
    %c0_86 = arith.constant 0 : index
    %c0_87 = arith.constant 0 : index
    %69 = vector.load %arg14[%c0_86, %c0_87] : memref<18x200xf32, #tpu.memory_space<vmem>>, vector<9x200xf32>
    %c0_88 = arith.constant 0 : index
    %c0_89 = arith.constant 0 : index
    %c0_90 = arith.constant 0 : index
    %70 = vector.load %arg7[%c0_88, %c0_89, %c0_90] : memref<2x9x200xf32, #tpu.memory_space<vmem>>, vector<1x9x200xf32>
    %71 = vector.shape_cast %70 : vector<1x9x200xf32> to vector<9x200xf32>
    %72 = arith.mulf %69, %71 : vector<9x200xf32>
    %cst_91 = arith.constant dense<0.000000e+00> : vector<9xf32>
    %73 = vector.multi_reduction <add>, %72, %cst_91 [1] : vector<9x200xf32> to vector<9xf32>
    %74 = vector.shape_cast %73 : vector<9xf32> to vector<9x1xf32>
    %c1_92 = arith.constant 1 : index
    %c0_93 = arith.constant 0 : index
    %c0_94 = arith.constant 0 : index
    %75 = vector.load %arg7[%c1_92, %c0_93, %c0_94] : memref<2x9x200xf32, #tpu.memory_space<vmem>>, vector<1x9x200xf32>
    %76 = vector.shape_cast %75 : vector<1x9x200xf32> to vector<9x200xf32>
    %77 = arith.mulf %69, %76 : vector<9x200xf32>
    %cst_95 = arith.constant dense<0.000000e+00> : vector<9xf32>
    %78 = vector.multi_reduction <add>, %77, %cst_95 [1] : vector<9x200xf32> to vector<9xf32>
    %79 = vector.shape_cast %78 : vector<9xf32> to vector<9x1xf32>
    %80 = tpu.concatenate %74, %79 in 1 : vector<9x1xf32>, vector<9x1xf32> -> vector<9x2xf32>
    %cst_96 = arith.constant dense<0.000000e+00> : vector<2xf32>
    %81 = vector.multi_reduction <add>, %80, %cst_96 [0] : vector<9x2xf32> to vector<2xf32>
    %82 = vector.shape_cast %81 : vector<2xf32> to vector<1x2xf32>
    %c9_97 = arith.constant 9 : index
    %c0_98 = arith.constant 0 : index
    %83 = vector.load %arg14[%c9_97, %c0_98] : memref<18x200xf32, #tpu.memory_space<vmem>>, vector<9x200xf32>
    %c0_99 = arith.constant 0 : index
    %c0_100 = arith.constant 0 : index
    %c0_101 = arith.constant 0 : index
    %84 = vector.load %arg7[%c0_99, %c0_100, %c0_101] : memref<2x9x200xf32, #tpu.memory_space<vmem>>, vector<1x9x200xf32>
    %85 = vector.shape_cast %84 : vector<1x9x200xf32> to vector<9x200xf32>
    %86 = arith.mulf %83, %85 : vector<9x200xf32>
    %cst_102 = arith.constant dense<0.000000e+00> : vector<9xf32>
    %87 = vector.multi_reduction <add>, %86, %cst_102 [1] : vector<9x200xf32> to vector<9xf32>
    %88 = vector.shape_cast %87 : vector<9xf32> to vector<9x1xf32>
    %c1_103 = arith.constant 1 : index
    %c0_104 = arith.constant 0 : index
    %c0_105 = arith.constant 0 : index
    %89 = vector.load %arg7[%c1_103, %c0_104, %c0_105] : memref<2x9x200xf32, #tpu.memory_space<vmem>>, vector<1x9x200xf32>
    %90 = vector.shape_cast %89 : vector<1x9x200xf32> to vector<9x200xf32>
    %91 = arith.mulf %83, %90 : vector<9x200xf32>
    %cst_106 = arith.constant dense<0.000000e+00> : vector<9xf32>
    %92 = vector.multi_reduction <add>, %91, %cst_106 [1] : vector<9x200xf32> to vector<9xf32>
    %93 = vector.shape_cast %92 : vector<9xf32> to vector<9x1xf32>
    %94 = tpu.concatenate %88, %93 in 1 : vector<9x1xf32>, vector<9x1xf32> -> vector<9x2xf32>
    %cst_107 = arith.constant dense<0.000000e+00> : vector<2xf32>
    %95 = vector.multi_reduction <add>, %94, %cst_107 [0] : vector<9x2xf32> to vector<2xf32>
    %96 = vector.shape_cast %95 : vector<2xf32> to vector<1x2xf32>
    %97 = tpu.concatenate %82, %96 in 0 : vector<1x2xf32>, vector<1x2xf32> -> vector<2x2xf32>
    %c0_108 = arith.constant 0 : index
    %c0_109 = arith.constant 0 : index
    %98 = vector.load %arg8[%c0_108, %c0_109] : memref<1x2xf32, #tpu.memory_space<vmem>>, vector<1x2xf32>
    %99 = vector.broadcast %98 : vector<1x2xf32> to vector<2x2xf32>
    %100 = arith.addf %97, %99 : vector<2x2xf32>
    %c0_110 = arith.constant 0 : index
    %c0_111 = arith.constant 0 : index
    %101 = vector.load %arg9[%c0_110, %c0_111] : memref<2x2xf32, #tpu.memory_space<vmem>>, vector<2x2xf32>
    tpu.vector_store %arg9[%c0_110, %c0_111], %100 {strides = array<i32>} : memref<2x2xf32, #tpu.memory_space<vmem>>, vector<2x2xf32>,
    return
  }
}

</mosaic_0001>

<llo_original>
// kernel: mynet1_forward.1
$region0: #{mynet1_forward.1}
  #allocation0 [shape = 'u32[]', space=smem, size = 0x4, offset = 0x4, fixed_abs, tag = 'smem constant byte address 0x4 - core index']
  #allocation1 [shape = 'u32[144,128]{1,0:T(1,128)}', space=vmem, size = 0x12000, scoped, tag = 'internal scratch']
  #allocation2 [shape = 'f32[126,50]{1,0:T(8,128)}', space=vmem, size = 0x10000, scoped, tag = 'scratch operand']
  #allocation3 [shape = 'f32[40,300]{1,0:T(8,128)}', space=vmem, size = 0xf000, scoped, tag = 'scratch operand']
  #allocation4 [shape = 'f32[40,100]{1,0:T(8,128)}', space=vmem, size = 0x5000, scoped, tag = 'scratch operand']
  #allocation5 [shape = 'f32[18,400]{1,0:T(8,128)}', space=vmem, size = 0xc000, scoped, tag = 'scratch operand']
  #allocation6 [shape = 'f32[18,200]{1,0:T(8,128)}', space=vmem, size = 0x6000, scoped, tag = 'scratch operand']
  %s0 = inlined_call_operand.vmem [shape: f32[126,8], index: 0, kind: input, shape index: {}]
  %s1 = inlined_call_operand.vmem [shape: f32[8,50], index: 1, kind: input, shape index: {}]
  %s2 = inlined_call_operand.vmem [shape: f32[1,50], index: 2, kind: input, shape index: {}]
  %s3 = inlined_call_operand.vmem [shape: bf16[300,100], index: 3, kind: input, shape index: {}]
  %s4 = inlined_call_operand.vmem [shape: f32[1,100], index: 4, kind: input, shape index: {}]
  %s5 = inlined_call_operand.vmem [shape: bf16[400,200], index: 5, kind: input, shape index: {}]
  %s6 = inlined_call_operand.vmem [shape: f32[1,200], index: 6, kind: input, shape index: {}]
  %s7 = inlined_call_operand.vmem [shape: f32[2,9,200], index: 7, kind: input, shape index: {}]
  %s8 = inlined_call_operand.vmem [shape: f32[1,2], index: 8, kind: input, shape index: {}]
  %s9 = inlined_call_operand.hbm [shape: f32[2,2], index: 9, kind: output, shape index: {}]
  %s10 = sld [smem:[#allocation0]]
  $region46: #{mynet1_forward.1} parent=0
    _
  %s12 = ssub.s32 1, %s10
  %s13 = scalar_select 0, %s12, %s10
  $region1: #{mynet1_forward.1} parent=0
    #allocation7 [shape = 'u8[1024]{0}', space=vmem, size = 0x400, scoped, tag = 'output window, operand 0, single buffered']
    #allocation8 [shape = 's32[1]{0}', space=sflag, size = 0x4, scoped, tag = 'scoped memory for mynet1_forward.1']
    %14 = vsyncpa [#allocation8], 0
    // Predicated region
    $region2: #{mynet1_forward.1} parent=1 // pred_check
      _
    $region3: #{mynet1_forward.1} parent=1 // pred_check_branch
      %16 = sbr.rel (0) target = $region5
    $region4: #{mynet1_forward.1} parent=1 // pred_region
      _
    $region5: #{mynet1_forward.1} parent=1 // pred_fallthru
      _
    // Predicated region
    $region6: #{mynet1_forward.1} parent=1 // pred_check
      _
    $region7: #{mynet1_forward.1} parent=1 // pred_check_branch
      %18 = sbr.rel (0) target = $region9
    $region8: #{mynet1_forward.1} parent=1 // pred_region
      _
    $region9: #{mynet1_forward.1} parent=1 // pred_fallthru
      _
    // Predicated region
    $region10: #{mynet1_forward.1} parent=1 // pred_check
      _
    $region11: #{mynet1_forward.1} parent=1 // pred_check_branch
      %20 = sbr.rel (0) target = $region13
    $region12: #{mynet1_forward.1} parent=1 // pred_region
      _
    $region13: #{mynet1_forward.1} parent=1 // pred_fallthru
      _
    // Predicated region
    $region14: #{mynet1_forward.1} parent=1 // pred_check
      _
    $region15: #{mynet1_forward.1} parent=1 // pred_check_branch
      %22 = sbr.rel (0) target = $region17
    $region16: #{mynet1_forward.1} parent=1 // pred_region
      _
    $region17: #{mynet1_forward.1} parent=1 // pred_fallthru
      _
    // Predicated region
    $region18: #{mynet1_forward.1} parent=1 // pred_check
      _
    $region19: #{mynet1_forward.1} parent=1 // pred_check_branch
      %24 = sbr.rel (0) target = $region21
    $region20: #{mynet1_forward.1} parent=1 // pred_region
      _
    $region21: #{mynet1_forward.1} parent=1 // pred_fallthru
      _
    // Predicated region
    $region22: #{mynet1_forward.1} parent=1 // pred_check
      _
    $region23: #{mynet1_forward.1} parent=1 // pred_check_branch
      %26 = sbr.rel (0) target = $region25
    $region24: #{mynet1_forward.1} parent=1 // pred_region
      _
    $region25: #{mynet1_forward.1} parent=1 // pred_fallthru
      _
    // Predicated region
    $region26: #{mynet1_forward.1} parent=1 // pred_check
      _
    $region27: #{mynet1_forward.1} parent=1 // pred_check_branch
      %28 = sbr.rel (0) target = $region29
    $region28: #{mynet1_forward.1} parent=1 // pred_region
      _
    $region29: #{mynet1_forward.1} parent=1 // pred_fallthru
      _
    // Predicated region
    $region30: #{mynet1_forward.1} parent=1 // pred_check
      _
    $region31: #{mynet1_forward.1} parent=1 // pred_check_branch
      %30 = sbr.rel (0) target = $region33
    $region32: #{mynet1_forward.1} parent=1 // pred_region
      _
    $region33: #{mynet1_forward.1} parent=1 // pred_fallthru
      _
    // Predicated region
    $region34: #{mynet1_forward.1} parent=1 // pred_check
      _
    $region35: #{mynet1_forward.1} parent=1 // pred_check_branch
      %32 = sbr.rel (0) target = $region37
    $region36: #{mynet1_forward.1} parent=1 // pred_region
      _
    $region37: #{mynet1_forward.1} parent=1 // pred_fallthru
      _
    %v34 = vld [vmem:[%s0] sm:$0xff]
    %v35 = vld [vmem:[%s0 + $0x8] sm:$0xff]
    %v36 = vld [vmem:[%s0 + $0x10] sm:$0xff]
    %v37 = vld [vmem:[%s0 + $0x18] sm:$0xff]
    %v38 = vld [vmem:[%s0 + $0x20] sm:$0xff]
    %v39 = vld [vmem:[%s0 + $0x28] sm:$0xff]
    %v40 = vld [vmem:[%s0 + $0x30] sm:$0xff]
    %v41 = vld [vmem:[%s0 + $0x38] sm:$0xff]
    %v42 = vld [vmem:[%s0 + $0x40] sm:$0xff]
    %v43 = vld [vmem:[%s0 + $0x48] sm:$0xff]
    %v44 = vld [vmem:[%s0 + $0x50] sm:$0xff]
    %v45 = vld [vmem:[%s0 + $0x58] sm:$0xff]
    %v46 = vld [vmem:[%s0 + $0x60] sm:$0xff]
    %v47 = vld [vmem:[%s0 + $0x68] sm:$0xff]
    %v48 = vld [vmem:[%s0 + $0x70] sm:$0xff]
    %v49 = vld [vmem:[%s0 + $0x78] sm:$0x3f]
    %v50 = vld [vmem:[%s1] sm:$0xff]
    %v51 = vld [vmem:[%s2] sm:$0x1]
    %v53 = vlaneseq
    %v54 = vshrl.u32 %v53, 7
    %v55 = vsub.s32 0, %v54
    %v56 = vrot.slane %v51, %v55
    %vm58 = vcmask 64512
    %v60 = vsel %vm58, %v34, 0
    %v63 = vsel %vm58, %v35, 0
    %v66 = vsel %vm58, %v36, 0
    %v69 = vsel %vm58, %v37, 0
    %v72 = vsel %vm58, %v38, 0
    %v75 = vsel %vm58, %v39, 0
    %v78 = vsel %vm58, %v40, 0
    %v81 = vsel %vm58, %v41, 0
    %v84 = vsel %vm58, %v42, 0
    %v87 = vsel %vm58, %v43, 0
    %v90 = vsel %vm58, %v44, 0
    %v93 = vsel %vm58, %v45, 0
    %v96 = vsel %vm58, %v46, 0
    %v99 = vsel %vm58, %v47, 0
    %v102 = vsel %vm58, %v48, 0
    %v105 = vsel %vm58, %v49, 0
    %107 = vmatprep.subr.mxu0 0.0
    %108 = vmatpush1.msra.mxu0 %v50
    %109 = vmatprep.subr.mxu0 0.0
    %110 = vmatpush1.msra.mxu0 0.0
    %111 = vmatprep.subr.mxu0 0.0
    %112 = vmatpush1.msra.mxu0 0.0
    %113 = vmatprep.subr.mxu0 0.0
    %114 = vmatpush1.msra.mxu0 0.0
    %115 = vmatprep.subr.mxu0 0.0
    %116 = vmatpush1.msra.mxu0 0.0
    %117 = vmatprep.subr.mxu0 0.0
    %118 = vmatpush1.msra.mxu0 0.0
    %119 = vmatprep.subr.mxu0 0.0
    %120 = vmatpush1.msra.mxu0 0.0
    %121 = vmatprep.subr.mxu0 0.0
    %122 = vmatpush1.msra.mxu0 0.0
    %123 = vmatprep.subr.mxu0 0.0
    %124 = vmatpush1.msra.mxu0 0.0
    %125 = vmatprep.subr.mxu0 0.0
    %126 = vmatpush1.msra.mxu0 0.0
    %127 = vmatprep.subr.mxu0 0.0
    %128 = vmatpush1.msra.mxu0 0.0
    %129 = vmatprep.subr.mxu0 0.0
    %130 = vmatpush1.msra.mxu0 0.0
    %131 = vmatprep.subr.mxu0 0.0
    %132 = vmatpush1.msra.mxu0 0.0
    %133 = vmatprep.subr.mxu0 0.0
    %134 = vmatpush1.msra.mxu0 0.0
    %135 = vmatprep.subr.mxu0 0.0
    %136 = vmatpush1.msra.mxu0 0.0
    %137 = vmatprep.subr.mxu0 0.0
    %138 = vmatpush1.msra.mxu0 0.0
    %139 = vmatprep.subr.mxu0 0.0
    %140 = vmatpush1.msra.mxu0 0.0
    %141 = vmatprep.subr.mxu0 0.0
    %142 = vmatpush1.msra.mxu0 0.0
    %143 = vmatprep.subr.mxu0 0.0
    %144 = vmatpush1.msra.mxu0 0.0
    %145 = vmatprep.subr.mxu0 0.0
    %146 = vmatpush1.msra.mxu0 0.0
    %147 = vmatprep.subr.mxu0 0.0
    %148 = vmatpush1.msra.mxu0 0.0
    %149 = vmatprep.subr.mxu0 0.0
    %150 = vmatpush1.msra.mxu0 0.0
    %151 = vmatprep.subr.mxu0 0.0
    %152 = vmatpush1.msra.mxu0 0.0
    %153 = vmatprep.subr.mxu0 0.0
    %154 = vmatpush1.msra.mxu0 0.0
    %155 = vmatprep.subr.mxu0 0.0
    %156 = vmatpush1.msra.mxu0 0.0
    %157 = vmatprep.subr.mxu0 0.0
    %158 = vmatpush1.msra.mxu0 0.0
    %159 = vmatprep.subr.mxu0 0.0
    %160 = vmatpush1.msra.mxu0 0.0
    %161 = vmatprep.subr.mxu0 0.0
    %162 = vmatpush1.msra.mxu0 0.0
    %163 = vmatprep.subr.mxu0 0.0
    %164 = vmatpush1.msra.mxu0 0.0
    %165 = vmatprep.subr.mxu0 0.0
    %166 = vmatpush1.msra.mxu0 0.0
    %167 = vmatprep.subr.mxu0 0.0
    %168 = vmatpush1.msra.mxu0 0.0
    %169 = vmatprep.subr.mxu0 0.0
    %170 = vmatpush1.msra.mxu0 0.0
    %171 = vmatprep.mubr.f32.mxu0 0.0
    %172 = vmatmul.mubr.f32.gmra.mrb[0].mxu0 %v60
    %v173 = vpop.f32.mrb[0].mxu0
    %v174 = vadd.f32 %v56, %v173
    %v175 = vpop.f32.mrb[0].mxu0
    %176 = vmatprep.mubr.f32.mxu0 0.0
    %177 = vmatmul.mubr.f32.gmra.mrb[0].mxu0 %v63
    %v178 = vpop.f32.mrb[0].mxu0
    %v179 = vadd.f32 %v56, %v178
    %v180 = vpop.f32.mrb[0].mxu0
    %181 = vmatprep.mubr.f32.mxu0 0.0
    %182 = vmatmul.mubr.f32.gmra.mrb[0].mxu0 %v66
    %v183 = vpop.f32.mrb[0].mxu0
    %v184 = vadd.f32 %v56, %v183
    %v185 = vpop.f32.mrb[0].mxu0
    %186 = vmatprep.mubr.f32.mxu0 0.0
    %187 = vmatmul.mubr.f32.gmra.mrb[0].mxu0 %v69
    %v188 = vpop.f32.mrb[0].mxu0
    %v189 = vadd.f32 %v56, %v188
    %v190 = vpop.f32.mrb[0].mxu0
    %191 = vmatprep.mubr.f32.mxu0 0.0
    %192 = vmatmul.mubr.f32.gmra.mrb[0].mxu0 %v72
    %v193 = vpop.f32.mrb[0].mxu0
    %v194 = vadd.f32 %v56, %v193
    %v195 = vpop.f32.mrb[0].mxu0
    %196 = vmatprep.mubr.f32.mxu0 0.0
    %197 = vmatmul.mubr.f32.gmra.mrb[0].mxu0 %v75
    %v198 = vpop.f32.mrb[0].mxu0
    %v199 = vadd.f32 %v56, %v198
    %v200 = vpop.f32.mrb[0].mxu0
    %201 = vmatprep.mubr.f32.mxu0 0.0
    %202 = vmatmul.mubr.f32.gmra.mrb[0].mxu0 %v78
    %v203 = vpop.f32.mrb[0].mxu0
    %v204 = vadd.f32 %v56, %v203
    %v205 = vpop.f32.mrb[0].mxu0
    %206 = vmatprep.mubr.f32.mxu0 0.0
    %207 = vmatmul.mubr.f32.gmra.mrb[0].mxu0 %v81
    %v208 = vpop.f32.mrb[0].mxu0
    %v209 = vadd.f32 %v56, %v208
    %v210 = vpop.f32.mrb[0].mxu0
    %211 = vmatprep.mubr.f32.mxu0 0.0
    %212 = vmatmul.mubr.f32.gmra.mrb[0].mxu0 %v84
    %v213 = vpop.f32.mrb[0].mxu0
    %v214 = vadd.f32 %v56, %v213
    %v215 = vpop.f32.mrb[0].mxu0
    %216 = vmatprep.mubr.f32.mxu0 0.0
    %217 = vmatmul.mubr.f32.gmra.mrb[0].mxu0 %v87
    %v218 = vpop.f32.mrb[0].mxu0
    %v219 = vadd.f32 %v56, %v218
    %v220 = vpop.f32.mrb[0].mxu0
    %221 = vmatprep.mubr.f32.mxu0 0.0
    %222 = vmatmul.mubr.f32.gmra.mrb[0].mxu0 %v90
    %v223 = vpop.f32.mrb[0].mxu0
    %v224 = vadd.f32 %v56, %v223
    %v225 = vpop.f32.mrb[0].mxu0
    %226 = vmatprep.mubr.f32.mxu0 0.0
    %227 = vmatmul.mubr.f32.gmra.mrb[0].mxu0 %v93
    %v228 = vpop.f32.mrb[0].mxu0
    %v229 = vadd.f32 %v56, %v228
    %v230 = vpop.f32.mrb[0].mxu0
    %231 = vmatprep.mubr.f32.mxu0 0.0
    %232 = vmatmul.mubr.f32.gmra.mrb[0].mxu0 %v96
    %v233 = vpop.f32.mrb[0].mxu0
    %v234 = vadd.f32 %v56, %v233
    %v235 = vpop.f32.mrb[0].mxu0
    %236 = vmatprep.mubr.f32.mxu0 0.0
    %237 = vmatmul.mubr.f32.gmra.mrb[0].mxu0 %v99
    %v238 = vpop.f32.mrb[0].mxu0
    %v239 = vadd.f32 %v56, %v238
    %v240 = vpop.f32.mrb[0].mxu0
    %241 = vmatprep.mubr.f32.mxu0 0.0
    %242 = vmatmul.mubr.f32.gmra.mrb[0].mxu0 %v102
    %v243 = vpop.f32.mrb[0].mxu0
    %v244 = vadd.f32 %v56, %v243
    %v245 = vpop.f32.mrb[0].mxu0
    %246 = vmatprep.mubr.f32.mxu0 0.0
    %247 = vmatmul.mubr.f32.gmra.mrb[0].mxu0 %v105
    %v248 = vpop.f32.mrb[0].mxu0
    %v249 = vadd.f32 %v56, %v248
    %v250 = vpop.f32.mrb[0].mxu0
    %251 = vdwg.mxu0
    %v252 = vmax.f32 %v174, 0.0
    %v253 = vmax.f32 %v179, 0.0
    %v254 = vmax.f32 %v184, 0.0
    %v255 = vmax.f32 %v189, 0.0
    %v256 = vmax.f32 %v194, 0.0
    %v257 = vmax.f32 %v199, 0.0
    %v258 = vmax.f32 %v204, 0.0
    %v259 = vmax.f32 %v209, 0.0
    %v260 = vmax.f32 %v214, 0.0
    %v261 = vmax.f32 %v219, 0.0
    %v262 = vmax.f32 %v224, 0.0
    %v263 = vmax.f32 %v229, 0.0
    %v264 = vmax.f32 %v234, 0.0
    %v265 = vmax.f32 %v239, 0.0
    %v266 = vmax.f32 %v244, 0.0
    %v267 = vmax.f32 %v249, 0.0
    %vm268 = vcmask 408576
    %269 = vst.msk [vmem:[#allocation2] sm:$0xff] %vm268, %v252
    %270 = vst.msk [vmem:[#allocation2 + $0x8] sm:$0xff] %vm268, %v253
    %271 = vst.msk [vmem:[#allocation2 + $0x10] sm:$0xff] %vm268, %v254
    %272 = vst.msk [vmem:[#allocation2 + $0x18] sm:$0xff] %vm268, %v255
    %273 = vst.msk [vmem:[#allocation2 + $0x20] sm:$0xff] %vm268, %v256
    %274 = vst.msk [vmem:[#allocation2 + $0x28] sm:$0xff] %vm268, %v257
    %275 = vst.msk [vmem:[#allocation2 + $0x30] sm:$0xff] %vm268, %v258
    %276 = vst.msk [vmem:[#allocation2 + $0x38] sm:$0xff] %vm268, %v259
    %277 = vst.msk [vmem:[#allocation2 + $0x40] sm:$0xff] %vm268, %v260
    %278 = vst.msk [vmem:[#allocation2 + $0x48] sm:$0xff] %vm268, %v261
    %279 = vst.msk [vmem:[#allocation2 + $0x50] sm:$0xff] %vm268, %v262
    %280 = vst.msk [vmem:[#allocation2 + $0x58] sm:$0xff] %vm268, %v263
    %281 = vst.msk [vmem:[#allocation2 + $0x60] sm:$0xff] %vm268, %v264
    %282 = vst.msk [vmem:[#allocation2 + $0x68] sm:$0xff] %vm268, %v265
    %283 = vst.msk [vmem:[#allocation2 + $0x70] sm:$0xff] %vm268, %v266
    %vm284 = vcmask 406528
    %285 = vst.msk [vmem:[#allocation2 + $0x78] sm:$0x3f] %vm284, %v267
    %v286 = vld [vmem:[#allocation2] ss:$3 sm:$0xff]
    %s287 = scalar_lea.vmem [#allocation2], 24
    %v288 = vld [vmem:[%s287] ss:$3 sm:$0xff]
    %s289 = scalar_lea.vmem [#allocation2], 48
    %v290 = vld [vmem:[%s289] ss:$3 sm:$0xf]
    %291 = vst.msk [vmem:[#allocation3] sm:$0xff] %vm268, %v286
    %292 = vst.msk [vmem:[#allocation3 + $0x18] sm:$0xff] %vm268, %v288
    %vm293 = vcmask 404480
    %294 = vst.msk [vmem:[#allocation3 + $0x30] sm:$0xf] %vm293, %v290
    %s295 = scalar_lea.vmem [#allocation2], 1
    %v296 = vld [vmem:[%s295] ss:$3 sm:$0xff]
    %s297 = scalar_lea.vmem [#allocation2], 25
    %v298 = vld [vmem:[%s297] ss:$3 sm:$0xff]
    %s299 = scalar_lea.vmem [#allocation2], 49
    %v300 = vld [vmem:[%s299] ss:$3 sm:$0xf]
    %304 = vrot.lane.b32.xlu0 %v296, 50
    %v305 = vpop.permute.xlu0 %304
    %306 = vrot.lane.b32.xlu0 %v298, 50
    %v307 = vpop.permute.xlu0 %306
    %308 = vrot.lane.b32.xlu0 %v300, 50
    %v309 = vpop.permute.xlu0 %308
    %vm313 = vcmask 818576
    %314 = vst.msk [vmem:[#allocation3] sm:$0xff] %vm313, %v305
    %315 = vst.msk [vmem:[#allocation3 + $0x18] sm:$0xff] %vm313, %v307
    %vm316 = vcmask 814480
    %317 = vst.msk [vmem:[#allocation3 + $0x30] sm:$0xf] %vm316, %v309
    %s318 = scalar_lea.vmem [#allocation2], 2
    %v319 = vld [vmem:[%s318] ss:$3 sm:$0xff]
    %s320 = scalar_lea.vmem [#allocation2], 26
    %v321 = vld [vmem:[%s320] ss:$3 sm:$0xff]
    %s322 = scalar_lea.vmem [#allocation2], 50
    %v323 = vld [vmem:[%s322] ss:$3 sm:$0xf]
    %327 = vrot.lane.b32.xlu0 %v319, 100
    %v328 = vpop.permute.xlu0 %327
    %329 = vrot.lane.b32.xlu0 %v321, 100
    %v330 = vpop.permute.xlu0 %329
    %331 = vrot.lane.b32.xlu0 %v323, 100
    %v332 = vpop.permute.xlu0 %331
    %vm336 = vcmask 1048352
    %337 = vst.msk [vmem:[#allocation3] sm:$0xff] %vm336, %v328
    %vm338 = vcmask 179200
    %339 = vst.msk [vmem:[#allocation3 + $0x8] sm:$0xff] %vm338, %v328
    %340 = vst.msk [vmem:[#allocation3 + $0x18] sm:$0xff] %vm336, %v330
    %341 = vst.msk [vmem:[#allocation3 + $0x20] sm:$0xff] %vm338, %v330
    %vm342 = vcmask 1044256
    %343 = vst.msk [vmem:[#allocation3 + $0x30] sm:$0xf] %vm342, %v332
    %vm344 = vcmask 175104
    %345 = vst.msk [vmem:[#allocation3 + $0x38] sm:$0xf] %vm344, %v332
    %s346 = scalar_lea.vmem [#allocation2], 3
    %v347 = vld [vmem:[%s346] ss:$3 sm:$0xff]
    %s348 = scalar_lea.vmem [#allocation2], 27
    %v349 = vld [vmem:[%s348] ss:$3 sm:$0xff]
    %s350 = scalar_lea.vmem [#allocation2], 51
    %v351 = vld [vmem:[%s350] ss:$3 sm:$0xf]
    %355 = vrot.lane.b32.xlu0 %v347, 22
    %v356 = vpop.permute.xlu0 %355
    %357 = vrot.lane.b32.xlu0 %v349, 22
    %v358 = vpop.permute.xlu0 %357
    %359 = vrot.lane.b32.xlu0 %v351, 22
    %v360 = vpop.permute.xlu0 %359
    %vm364 = vcmask 588976
    %365 = vst.msk [vmem:[#allocation3 + $0x8] sm:$0xff] %vm364, %v356
    %366 = vst.msk [vmem:[#allocation3 + $0x20] sm:$0xff] %vm364, %v358
    %vm367 = vcmask 584880
    %368 = vst.msk [vmem:[#allocation3 + $0x38] sm:$0xf] %vm367, %v360
    %s369 = scalar_lea.vmem [#allocation2], 4
    %v370 = vld [vmem:[%s369] ss:$3 sm:$0xff]
    %s371 = scalar_lea.vmem [#allocation2], 28
    %v372 = vld [vmem:[%s371] ss:$3 sm:$0xff]
    %s373 = scalar_lea.vmem [#allocation2], 52
    %v374 = vld [vmem:[%s373] ss:$3 sm:$0xf]
    %378 = vrot.lane.b32.xlu0 %v370, 72
    %v379 = vpop.permute.xlu0 %378
    %380 = vrot.lane.b32.xlu0 %v372, 72
    %v381 = vpop.permute.xlu0 %380
    %382 = vrot.lane.b32.xlu0 %v374, 72
    %v383 = vpop.permute.xlu0 %382
    %vm387 = vcmask 998976
    %388 = vst.msk [vmem:[#allocation3 + $0x8] sm:$0xff] %vm387, %v379
    %389 = vst.msk [vmem:[#allocation3 + $0x20] sm:$0xff] %vm387, %v381
    %vm390 = vcmask 994880
    %391 = vst.msk [vmem:[#allocation3 + $0x38] sm:$0xf] %vm390, %v383
    %s392 = scalar_lea.vmem [#allocation2], 5
    %v393 = vld [vmem:[%s392] ss:$3 sm:$0xff]
    %s394 = scalar_lea.vmem [#allocation2], 29
    %v395 = vld [vmem:[%s394] ss:$3 sm:$0xff]
    %s396 = scalar_lea.vmem [#allocation2], 53
    %v397 = vld [vmem:[%s396] ss:$3 sm:$0xf]
    %401 = vrot.lane.b32.xlu0 %v393, 122
    %v402 = vpop.permute.xlu0 %401
    %403 = vrot.lane.b32.xlu0 %v395, 122
    %v404 = vpop.permute.xlu0 %403
    %405 = vrot.lane.b32.xlu0 %v397, 122
    %v406 = vpop.permute.xlu0 %405
    %vm410 = vcmask 1048528
    %411 = vst.msk [vmem:[#allocation3 + $0x8] sm:$0xff] %vm410, %v402
    %vm412 = vcmask 359424
    %413 = vst.msk [vmem:[#allocation3 + $0x10] sm:$0xff] %vm412, %v402
    %414 = vst.msk [vmem:[#allocation3 + $0x20] sm:$0xff] %vm410, %v404
    %415 = vst.msk [vmem:[#allocation3 + $0x28] sm:$0xff] %vm412, %v404
    %vm416 = vcmask 1044432
    %417 = vst.msk [vmem:[#allocation3 + $0x38] sm:$0xf] %vm416, %v406
    %vm418 = vcmask 355328
    %419 = vst.msk [vmem:[#allocation3 + $0x40] sm:$0xf] %vm418, %v406
    %s420 = scalar_lea.vmem [#allocation2], 63
    %v421 = vld [vmem:[%s420] ss:$3 sm:$0xff]
    %s422 = scalar_lea.vmem [#allocation2], 87
    %v423 = vld [vmem:[%s422] ss:$3 sm:$0xff]
    %s424 = scalar_lea.vmem [#allocation2], 111
    %v425 = vld [vmem:[%s424] ss:$3 sm:$0xf]
    %vm429 = vcmask 1043456
    %v430 = vrot.slane %v421, 4
    %v431 = vrot.slane %v423, 4
    %v432 = vsel %vm429, %v430, %v431
    %v433 = vrot.slane %v425, 4
    %v434 = vsel %vm429, %v431, %v433
    %vm438 = vcmask 408580
    %439 = vst.msk [vmem:[#allocation3 + $0x30] sm:$0xf0] %vm438, %v430
    %440 = vst.msk [vmem:[#allocation3 + $0x48] sm:$0xff] %vm268, %v432
    %441 = vst.msk [vmem:[#allocation3 + $0x60] sm:$0xff] %vm268, %v434
    %s442 = scalar_lea.vmem [#allocation2], 64
    %v443 = vld [vmem:[%s442] ss:$3 sm:$0xff]
    %s444 = scalar_lea.vmem [#allocation2], 88
    %v445 = vld [vmem:[%s444] ss:$3 sm:$0xff]
    %s446 = scalar_lea.vmem [#allocation2], 112
    %v447 = vld [vmem:[%s446] ss:$3 sm:$0xf]
    %v451 = vrot.slane %v443, 4
    %v452 = vrot.slane %v445, 4
    %v453 = vsel %vm429, %v451, %v452
    %v454 = vrot.slane %v447, 4
    %v455 = vsel %vm429, %v452, %v454
    %456 = vrot.lane.b32.xlu0 %v451, 50
    %v457 = vpop.permute.xlu0 %456
    %458 = vrot.lane.b32.xlu0 %v453, 50
    %v459 = vpop.permute.xlu0 %458
    %460 = vrot.lane.b32.xlu0 %v455, 50
    %v461 = vpop.permute.xlu0 %460
    %vm465 = vcmask 818580
    %466 = vst.msk [vmem:[#allocation3 + $0x30] sm:$0xf0] %vm465, %v457
    %467 = vst.msk [vmem:[#allocation3 + $0x48] sm:$0xff] %vm313, %v459
    %468 = vst.msk [vmem:[#allocation3 + $0x60] sm:$0xff] %vm313, %v461
    %s469 = scalar_lea.vmem [#allocation2], 65
    %v470 = vld [vmem:[%s469] ss:$3 sm:$0xff]
    %s471 = scalar_lea.vmem [#allocation2], 89
    %v472 = vld [vmem:[%s471] ss:$3 sm:$0xff]
    %s473 = scalar_lea.vmem [#allocation2], 113
    %v474 = vld [vmem:[%s473] ss:$3 sm:$0xf]
    %v478 = vrot.slane %v470, 4
    %v479 = vrot.slane %v472, 4
    %v480 = vsel %vm429, %v478, %v479
    %v481 = vrot.slane %v474, 4
    %v482 = vsel %vm429, %v479, %v481
    %483 = vrot.lane.b32.xlu0 %v478, 100
    %v484 = vpop.permute.xlu0 %483
    %485 = vrot.lane.b32.xlu0 %v480, 100
    %v486 = vpop.permute.xlu0 %485
    %487 = vrot.lane.b32.xlu0 %v482, 100
    %v488 = vpop.permute.xlu0 %487
    %vm492 = vcmask 1048356
    %493 = vst.msk [vmem:[#allocation3 + $0x30] sm:$0xf0] %vm492, %v484
    %vm494 = vcmask 179204
    %495 = vst.msk [vmem:[#allocation3 + $0x38] sm:$0xf0] %vm494, %v484
    %496 = vst.msk [vmem:[#allocation3 + $0x48] sm:$0xff] %vm336, %v486
    %497 = vst.msk [vmem:[#allocation3 + $0x50] sm:$0xff] %vm338, %v486
    %498 = vst.msk [vmem:[#allocation3 + $0x60] sm:$0xff] %vm336, %v488
    %499 = vst.msk [vmem:[#allocation3 + $0x68] sm:$0xff] %vm338, %v488
    %s500 = scalar_lea.vmem [#allocation2], 66
    %v501 = vld [vmem:[%s500] ss:$3 sm:$0xff]
    %s502 = scalar_lea.vmem [#allocation2], 90
    %v503 = vld [vmem:[%s502] ss:$3 sm:$0xff]
    %s504 = scalar_lea.vmem [#allocation2], 114
    %v505 = vld [vmem:[%s504] ss:$3 sm:$0xf]
    %v509 = vrot.slane %v501, 4
    %v510 = vrot.slane %v503, 4
    %v511 = vsel %vm429, %v509, %v510
    %v512 = vrot.slane %v505, 4
    %v513 = vsel %vm429, %v510, %v512
    %514 = vrot.lane.b32.xlu0 %v509, 22
    %v515 = vpop.permute.xlu0 %514
    %516 = vrot.lane.b32.xlu0 %v511, 22
    %v517 = vpop.permute.xlu0 %516
    %518 = vrot.lane.b32.xlu0 %v513, 22
    %v519 = vpop.permute.xlu0 %518
    %vm523 = vcmask 588980
    %524 = vst.msk [vmem:[#allocation3 + $0x38] sm:$0xf0] %vm523, %v515
    %525 = vst.msk [vmem:[#allocation3 + $0x50] sm:$0xff] %vm364, %v517
    %526 = vst.msk [vmem:[#allocation3 + $0x68] sm:$0xff] %vm364, %v519
    %s527 = scalar_lea.vmem [#allocation2], 67
    %v528 = vld [vmem:[%s527] ss:$3 sm:$0xff]
    %s529 = scalar_lea.vmem [#allocation2], 91
    %v530 = vld [vmem:[%s529] ss:$3 sm:$0xff]
    %s531 = scalar_lea.vmem [#allocation2], 115
    %v532 = vld [vmem:[%s531] ss:$3 sm:$0xf]
    %v536 = vrot.slane %v528, 4
    %v537 = vrot.slane %v530, 4
    %v538 = vsel %vm429, %v536, %v537
    %v539 = vrot.slane %v532, 4
    %v540 = vsel %vm429, %v537, %v539
    %541 = vrot.lane.b32.xlu0 %v536, 72
    %v542 = vpop.permute.xlu0 %541
    %543 = vrot.lane.b32.xlu0 %v538, 72
    %v544 = vpop.permute.xlu0 %543
    %545 = vrot.lane.b32.xlu0 %v540, 72
    %v546 = vpop.permute.xlu0 %545
    %vm550 = vcmask 998980
    %551 = vst.msk [vmem:[#allocation3 + $0x38] sm:$0xf0] %vm550, %v542
    %552 = vst.msk [vmem:[#allocation3 + $0x50] sm:$0xff] %vm387, %v544
    %553 = vst.msk [vmem:[#allocation3 + $0x68] sm:$0xff] %vm387, %v546
    %s554 = scalar_lea.vmem [#allocation2], 68
    %v555 = vld [vmem:[%s554] ss:$3 sm:$0xff]
    %s556 = scalar_lea.vmem [#allocation2], 92
    %v557 = vld [vmem:[%s556] ss:$3 sm:$0xff]
    %s558 = scalar_lea.vmem [#allocation2], 116
    %v559 = vld [vmem:[%s558] ss:$3 sm:$0xf]
    %v563 = vrot.slane %v555, 4
    %v564 = vrot.slane %v557, 4
    %v565 = vsel %vm429, %v563, %v564
    %v566 = vrot.slane %v559, 4
    %v567 = vsel %vm429, %v564, %v566
    %568 = vrot.lane.b32.xlu0 %v563, 122
    %v569 = vpop.permute.xlu0 %568
    %570 = vrot.lane.b32.xlu0 %v565, 122
    %v571 = vpop.permute.xlu0 %570
    %572 = vrot.lane.b32.xlu0 %v567, 122
    %v573 = vpop.permute.xlu0 %572
    %vm577 = vcmask 1048532
    %578 = vst.msk [vmem:[#allocation3 + $0x38] sm:$0xf0] %vm577, %v569
    %vm579 = vcmask 359428
    %580 = vst.msk [vmem:[#allocation3 + $0x40] sm:$0xf0] %vm579, %v569
    %581 = vst.msk [vmem:[#allocation3 + $0x50] sm:$0xff] %vm410, %v571
    %582 = vst.msk [vmem:[#allocation3 + $0x58] sm:$0xff] %vm412, %v571
    %583 = vst.msk [vmem:[#allocation3 + $0x68] sm:$0xff] %vm410, %v573
    %584 = vst.msk [vmem:[#allocation3 + $0x70] sm:$0xff] %vm412, %v573
    %v585 = vld [vmem:[#allocation3] sm:$0xff]
    %v586 = vld [vmem:[#allocation3 + $0x8] sm:$0xff]
    %v587 = vld [vmem:[#allocation3 + $0x10] sm:$0xff]
    %v588 = vld [vmem:[#allocation3 + $0x18] sm:$0xff]
    %v589 = vld [vmem:[#allocation3 + $0x20] sm:$0xff]
    %v590 = vld [vmem:[#allocation3 + $0x28] sm:$0xff]
    %v591 = vld [vmem:[#allocation3 + $0x30] sm:$0xff]
    %v592 = vld [vmem:[#allocation3 + $0x38] sm:$0xff]
    %v593 = vld [vmem:[#allocation3 + $0x40] sm:$0xff]
    %v594 = vld [vmem:[#allocation3 + $0x48] sm:$0xff]
    %v595 = vld [vmem:[#allocation3 + $0x50] sm:$0xff]
    %v596 = vld [vmem:[#allocation3 + $0x58] sm:$0xff]
    %v597 = vld [vmem:[#allocation3 + $0x60] sm:$0xff]
    %v598 = vld [vmem:[#allocation3 + $0x68] sm:$0xff]
    %v599 = vld [vmem:[#allocation3 + $0x70] sm:$0xff]
    %v600 = vpack.c.bf16 %v588, %v585
    %v601 = vpack.c.bf16 %v589, %v586
    %v602 = vpack.c.bf16 %v590, %v587
    %v603 = vpack.c.bf16 %v594, %v591
    %v604 = vpack.c.bf16 %v595, %v592
    %v605 = vpack.c.bf16 %v596, %v593
    %v606 = vpack.c.bf16 %v597, %v597
    %v607 = vpack.c.bf16 %v598, %v598
    %v608 = vpack.c.bf16 %v599, %v599
    %v609 = vld [vmem:[%s3] sm:$0xf]
    %v610 = vld [vmem:[%s3 + $0x4] sm:$0xf]
    %v611 = vld [vmem:[%s3 + $0x8] sm:$0xf]
    %v612 = vld [vmem:[%s3 + $0xc] sm:$0xf]
    %v613 = vld [vmem:[%s3 + $0x10] sm:$0xf]
    %v614 = vld [vmem:[%s3 + $0x14] sm:$0xf]
    %v615 = vld [vmem:[%s3 + $0x18] sm:$0xf]
    %v616 = vld [vmem:[%s3 + $0x1c] sm:$0xf]
    %v617 = vld [vmem:[%s3 + $0x20] sm:$0xf]
    %v618 = vld [vmem:[%s3 + $0x24] sm:$0xf]
    %v619 = vld [vmem:[%s3 + $0x28] sm:$0xf]
    %v620 = vld [vmem:[%s3 + $0x2c] sm:$0xf]
    %v621 = vld [vmem:[%s3 + $0x30] sm:$0xf]
    %v622 = vld [vmem:[%s3 + $0x34] sm:$0xf]
    %v623 = vld [vmem:[%s3 + $0x38] sm:$0xf]
    %v624 = vld [vmem:[%s3 + $0x3c] sm:$0xf]
    %v625 = vld [vmem:[%s3 + $0x40] sm:$0xf]
    %v626 = vld [vmem:[%s3 + $0x44] sm:$0xf]
    %v627 = vld [vmem:[%s3 + $0x48] sm:$0xf]
    %v628 = vld [vmem:[%s3 + $0x4c] sm:$0xf]
    %v629 = vld [vmem:[%s3 + $0x50] sm:$0xf]
    %v630 = vld [vmem:[%s3 + $0x54] sm:$0xf]
    %v631 = vld [vmem:[%s3 + $0x58] sm:$0xf]
    %v632 = vld [vmem:[%s3 + $0x5c] sm:$0xf]
    %v633 = vld [vmem:[%s3 + $0x60] sm:$0xf]
    %v634 = vld [vmem:[%s3 + $0x64] sm:$0xf]
    %v635 = vld [vmem:[%s3 + $0x68] sm:$0xf]
    %v636 = vld [vmem:[%s3 + $0x6c] sm:$0xf]
    %v637 = vld [vmem:[%s3 + $0x70] sm:$0xf]
    %v638 = vld [vmem:[%s3 + $0x74] sm:$0xf]
    %v639 = vld [vmem:[%s3 + $0x78] sm:$0xf]
    %v640 = vld [vmem:[%s3 + $0x7c] sm:$0xf]
    %v641 = vld [vmem:[%s3 + $0x80] sm:$0xf]
    %v642 = vld [vmem:[%s3 + $0x84] sm:$0xf]
    %v643 = vld [vmem:[%s3 + $0x88] sm:$0xf]
    %v644 = vld [vmem:[%s3 + $0x8c] sm:$0xf]
    %v645 = vld [vmem:[%s3 + $0x90] sm:$0xf]
    %v646 = vld [vmem:[%s3 + $0x94] sm:$0x3]
    %v647 = vld [vmem:[%s4] sm:$0x1]
    %v649 = vlaneseq
    %v650 = vshrl.u32 %v649, 7
    %v651 = vsub.s32 0, %v650
    %v652 = vrot.slane %v647, %v651
    %v692 = vunpack.c.l.b16 %v609
    %v693 = vunpack.c.l.b16 %v610
    %v694 = vunpack.c.l.b16 %v611
    %v695 = vunpack.c.l.b16 %v612
    %v696 = vunpack.c.l.b16 %v613
    %v697 = vunpack.c.l.b16 %v614
    %v698 = vunpack.c.l.b16 %v615
    %v699 = vunpack.c.l.b16 %v616
    %v700 = vunpack.c.l.b16 %v617
    %v701 = vunpack.c.l.b16 %v618
    %v702 = vunpack.c.l.b16 %v619
    %v703 = vunpack.c.l.b16 %v620
    %v704 = vunpack.c.l.b16 %v621
    %v705 = vunpack.c.l.b16 %v622
    %v706 = vunpack.c.l.b16 %v623
    %v707 = vunpack.c.l.b16 %v624
    %v708 = vunpack.c.l.b16 %v625
    %v709 = vunpack.c.l.b16 %v626
    %v710 = vunpack.c.l.b16 %v627
    %v711 = vunpack.c.l.b16 %v628
    %v712 = vunpack.c.l.b16 %v629
    %v713 = vunpack.c.l.b16 %v630
    %v714 = vunpack.c.l.b16 %v631
    %v715 = vunpack.c.l.b16 %v632
    %v716 = vunpack.c.l.b16 %v633
    %v717 = vunpack.c.l.b16 %v634
    %v718 = vunpack.c.l.b16 %v635
    %v719 = vunpack.c.l.b16 %v636
    %v720 = vunpack.c.l.b16 %v637
    %v721 = vunpack.c.l.b16 %v638
    %v722 = vunpack.c.l.b16 %v639
    %v723 = vunpack.c.l.b16 %v640
    %v724 = vunpack.c.l.b16 %v641
    %v725 = vunpack.c.l.b16 %v642
    %v726 = vunpack.c.l.b16 %v643
    %v727 = vunpack.c.l.b16 %v644
    %v728 = vunpack.c.l.b16 %v645
    %v729 = vunpack.c.l.b16 %v646
    %v730 = vpack.c.b16 %v693, %v692
    %v731 = vpack.c.b16 %v695, %v694
    %v732 = vpack.c.b16 %v697, %v696
    %v733 = vpack.c.b16 %v699, %v698
    %v734 = vpack.c.b16 %v701, %v700
    %v735 = vpack.c.b16 %v703, %v702
    %v736 = vpack.c.b16 %v705, %v704
    %v737 = vpack.c.b16 %v707, %v706
    %v738 = vpack.c.b16 %v709, %v708
    %v739 = vpack.c.b16 %v711, %v710
    %v740 = vpack.c.b16 %v713, %v712
    %v741 = vpack.c.b16 %v715, %v714
    %v742 = vpack.c.b16 %v717, %v716
    %v743 = vpack.c.b16 %v719, %v718
    %v744 = vpack.c.b16 %v721, %v720
    %v745 = vpack.c.b16 %v723, %v722
    %v746 = vpack.c.b16 %v725, %v724
    %v747 = vpack.c.b16 %v727, %v726
    %v748 = vpack.c.b16 %v729, %v728
    %v768 = vsel %vm412, %v602, 0
    %v771 = vsel %vm412, %v605, 0
    %v774 = vsel %vm412, %v608, 0
    %vm776 = vcmask 1045504
    %v778 = vsel %vm776, %v748, 0
    %780 = vmatprep.subr.bf16.mxu0 0
    %781 = vmatpush1.bf16.msra.mxu0 %v730
    %782 = vmatprep.subr.bf16.mxu0 0
    %783 = vmatpush1.bf16.msra.mxu0 %v731
    %784 = vmatprep.subr.bf16.mxu0 0
    %785 = vmatpush1.bf16.msra.mxu0 %v732
    %786 = vmatprep.subr.bf16.mxu0 0
    %787 = vmatpush1.bf16.msra.mxu0 %v733
    %788 = vmatprep.subr.bf16.mxu0 0
    %789 = vmatpush1.bf16.msra.mxu0 %v734
    %790 = vmatprep.subr.bf16.mxu0 0
    %791 = vmatpush1.bf16.msra.mxu0 %v735
    %792 = vmatprep.subr.bf16.mxu0 0
    %793 = vmatpush1.bf16.msra.mxu0 %v736
    %794 = vmatprep.subr.bf16.mxu0 0
    %795 = vmatpush1.bf16.msra.mxu0 %v737
    %796 = vmatprep.subr.bf16.mxu0 0
    %797 = vmatpush1.bf16.msra.mxu0 %v738
    %798 = vmatprep.subr.bf16.mxu0 0
    %799 = vmatpush1.bf16.msra.mxu0 %v739
    %800 = vmatprep.subr.bf16.mxu0 0
    %801 = vmatpush1.bf16.msra.mxu0 %v740
    %802 = vmatprep.subr.bf16.mxu0 0
    %803 = vmatpush1.bf16.msra.mxu0 %v741
    %804 = vmatprep.subr.bf16.mxu0 0
    %805 = vmatpush1.bf16.msra.mxu0 %v742
    %806 = vmatprep.subr.bf16.mxu0 0
    %807 = vmatpush1.bf16.msra.mxu0 %v743
    %808 = vmatprep.subr.bf16.mxu0 0
    %809 = vmatpush1.bf16.msra.mxu0 %v744
    %810 = vmatprep.subr.bf16.mxu0 0
    %811 = vmatpush1.bf16.msra.mxu0 %v745
    %812 = vmatprep.mubr.bf16.mxu0 %v601
    %813 = vmatmul.mubr.bf16.gmra.mrb[0].mxu0 %v600
    %v814 = vpop.f32.mrb[0].mxu0
    %v815 = vadd.f32 %v652, %v814
    %v816 = vpop.f32.mrb[0].mxu0
    %v817 = vpop.f32.mrb[0].mxu0
    %v818 = vadd.f32 %v652, %v817
    %v819 = vpop.f32.mrb[0].mxu0
    %820 = vmatprep.mubr.bf16.mxu0 %v604
    %821 = vmatmul.mubr.bf16.gmra.mrb[0].mxu0 %v603
    %v822 = vpop.f32.mrb[0].mxu0
    %v823 = vadd.f32 %v652, %v822
    %v824 = vpop.f32.mrb[0].mxu0
    %v825 = vpop.f32.mrb[0].mxu0
    %v826 = vadd.f32 %v652, %v825
    %v827 = vpop.f32.mrb[0].mxu0
    %828 = vmatprep.mubr.bf16.mxu0 %v607
    %829 = vmatmul.mubr.bf16.gmra.mrb[0].mxu0 %v606
    %v830 = vpop.f32.mrb[0].mxu0
    %v831 = vadd.f32 %v652, %v830
    %v832 = vpop.f32.mrb[0].mxu0
    %v833 = vpop.f32.mrb[0].mxu0
    %v834 = vpop.f32.mrb[0].mxu0
    %835 = vdwg.mxu0
    %836 = vmatprep.subr.bf16.mxu0 0
    %837 = vmatpush1.bf16.msra.mxu0 %v746
    %838 = vmatprep.subr.bf16.mxu0 0
    %839 = vmatpush1.bf16.msra.mxu0 %v747
    %840 = vmatprep.subr.bf16.mxu0 0
    %841 = vmatpush1.bf16.msra.mxu0 %v778
    %842 = vmatprep.subr.bf16.mxu0 0
    %843 = vmatpush1.bf16.msra.mxu0 0
    %844 = vmatprep.subr.bf16.mxu0 0
    %845 = vmatpush1.bf16.msra.mxu0 0
    %846 = vmatprep.subr.bf16.mxu0 0
    %847 = vmatpush1.bf16.msra.mxu0 0
    %848 = vmatprep.subr.bf16.mxu0 0
    %849 = vmatpush1.bf16.msra.mxu0 0
    %850 = vmatprep.subr.bf16.mxu0 0
    %851 = vmatpush1.bf16.msra.mxu0 0
    %852 = vmatprep.subr.bf16.mxu0 0
    %853 = vmatpush1.bf16.msra.mxu0 0
    %854 = vmatprep.subr.bf16.mxu0 0
    %855 = vmatpush1.bf16.msra.mxu0 0
    %856 = vmatprep.subr.bf16.mxu0 0
    %857 = vmatpush1.bf16.msra.mxu0 0
    %858 = vmatprep.subr.bf16.mxu0 0
    %859 = vmatpush1.bf16.msra.mxu0 0
    %860 = vmatprep.subr.bf16.mxu0 0
    %861 = vmatpush1.bf16.msra.mxu0 0
    %862 = vmatprep.subr.bf16.mxu0 0
    %863 = vmatpush1.bf16.msra.mxu0 0
    %864 = vmatprep.subr.bf16.mxu0 0
    %865 = vmatpush1.bf16.msra.mxu0 0
    %866 = vmatprep.subr.bf16.mxu0 0
    %867 = vmatpush1.bf16.msra.mxu0 0
    %868 = vmatprep.mubr.bf16.mxu0 0
    %869 = vmatmul.mubr.bf16.gmra.mrb[0].mxu0 %v768
    %v870 = vpop.f32.mrb[0].mxu0
    %v871 = vadd.f32 %v815, %v870
    %v872 = vpop.f32.mrb[0].mxu0
    %v873 = vpop.f32.mrb[0].mxu0
    %v874 = vadd.f32 %v818, %v873
    %v875 = vpop.f32.mrb[0].mxu0
    %876 = vmatprep.mubr.bf16.mxu0 0
    %877 = vmatmul.mubr.bf16.gmra.mrb[0].mxu0 %v771
    %v878 = vpop.f32.mrb[0].mxu0
    %v879 = vadd.f32 %v823, %v878
    %v880 = vpop.f32.mrb[0].mxu0
    %v881 = vpop.f32.mrb[0].mxu0
    %v882 = vadd.f32 %v826, %v881
    %v883 = vpop.f32.mrb[0].mxu0
    %884 = vmatprep.mubr.bf16.mxu0 0
    %885 = vmatmul.mubr.bf16.gmra.mrb[0].mxu0 %v774
    %v886 = vpop.f32.mrb[0].mxu0
    %v887 = vadd.f32 %v831, %v886
    %v888 = vpop.f32.mrb[0].mxu0
    %v889 = vpop.f32.mrb[0].mxu0
    %v890 = vpop.f32.mrb[0].mxu0
    %891 = vdwg.mxu0
    %v892 = vmax.f32 %v871, 0.0
    %v893 = vmax.f32 %v874, 0.0
    %v894 = vmax.f32 %v879, 0.0
    %v895 = vmax.f32 %v882, 0.0
    %v896 = vmax.f32 %v887, 0.0
    %vm897 = vcmask 818176
    %898 = vst.msk [vmem:[#allocation4] sm:$0xff] %vm897, %v892
    %899 = vst.msk [vmem:[#allocation4 + $0x8] sm:$0xff] %vm897, %v893
    %900 = vst.msk [vmem:[#allocation4 + $0x10] sm:$0xff] %vm897, %v894
    %901 = vst.msk [vmem:[#allocation4 + $0x18] sm:$0xff] %vm897, %v895
    %902 = vst.msk [vmem:[#allocation4 + $0x20] sm:$0xff] %vm897, %v896
    %v903 = vld [vmem:[#allocation4] ss:$2 sm:$0xff]
    %s904 = scalar_lea.vmem [#allocation4], 16
    %v905 = vld [vmem:[%s904] ss:$2 sm:$0x1]
    %906 = vst.msk [vmem:[#allocation5] sm:$0xff] %vm897, %v903
    %vm907 = vcmask 811008
    %908 = vst.msk [vmem:[#allocation5 + $0x20] sm:$0x1] %vm907, %v905
    %s909 = scalar_lea.vmem [#allocation4], 1
    %v910 = vld [vmem:[%s909] ss:$2 sm:$0xff]
    %s911 = scalar_lea.vmem [#allocation4], 17
    %v912 = vld [vmem:[%s911] ss:$2 sm:$0x1]
    %915 = vrot.lane.b32.xlu0 %v910, 100
    %v916 = vpop.permute.xlu0 %915
    %917 = vrot.lane.b32.xlu0 %v912, 100
    %v918 = vpop.permute.xlu0 %917
    %921 = vst.msk [vmem:[#allocation5] sm:$0xff] %vm336, %v916
    %vm922 = vcmask 588800
    %923 = vst.msk [vmem:[#allocation5 + $0x8] sm:$0xff] %vm922, %v916
    %vm924 = vcmask 1041184
    %925 = vst.msk [vmem:[#allocation5 + $0x20] sm:$0x1] %vm924, %v918
    %vm926 = vcmask 581632
    %927 = vst.msk [vmem:[#allocation5 + $0x28] sm:$0x1] %vm926, %v918
    %s928 = scalar_lea.vmem [#allocation4], 2
    %v929 = vld [vmem:[%s928] ss:$2 sm:$0xff]
    %s930 = scalar_lea.vmem [#allocation4], 18
    %v931 = vld [vmem:[%s930] ss:$2 sm:$0x1]
    %934 = vrot.lane.b32.xlu0 %v929, 72
    %v935 = vpop.permute.xlu0 %934
    %936 = vrot.lane.b32.xlu0 %v931, 72
    %v937 = vpop.permute.xlu0 %936
    %vm940 = vcmask 1048128
    %941 = vst.msk [vmem:[#allocation5 + $0x8] sm:$0xff] %vm940, %v935
    %942 = vst.msk [vmem:[#allocation5 + $0x10] sm:$0xff] %vm412, %v935
    %vm943 = vcmask 1040960
    %944 = vst.msk [vmem:[#allocation5 + $0x28] sm:$0x1] %vm943, %v937
    %vm945 = vcmask 352256
    %946 = vst.msk [vmem:[#allocation5 + $0x30] sm:$0x1] %vm945, %v937
    %s947 = scalar_lea.vmem [#allocation4], 3
    %v948 = vld [vmem:[%s947] ss:$2 sm:$0xff]
    %s949 = scalar_lea.vmem [#allocation4], 19
    %v950 = vld [vmem:[%s949] ss:$2 sm:$0x1]
    %953 = vrot.lane.b32.xlu0 %v948, 44
    %v954 = vpop.permute.xlu0 %953
    %955 = vrot.lane.b32.xlu0 %v950, 44
    %v956 = vpop.permute.xlu0 %955
    %vm959 = vcmask 1047904
    %960 = vst.msk [vmem:[#allocation5 + $0x10] sm:$0xff] %vm959, %v954
    %vm961 = vcmask 130048
    %962 = vst.msk [vmem:[#allocation5 + $0x18] sm:$0xff] %vm961, %v954
    %vm963 = vcmask 1040736
    %964 = vst.msk [vmem:[#allocation5 + $0x30] sm:$0x1] %vm963, %v956
    %vm965 = vcmask 122880
    %966 = vst.msk [vmem:[#allocation5 + $0x38] sm:$0x1] %vm965, %v956
    %s967 = scalar_lea.vmem [#allocation4], 20
    %v968 = vld [vmem:[%s967] ss:$2 sm:$0xff]
    %s969 = scalar_lea.vmem [#allocation4], 36
    %v970 = vld [vmem:[%s969] ss:$2 sm:$0x1]
    %vm973 = vcmask 1040384
    %v974 = vrot.slane %v968, 7
    %v975 = vrot.slane %v970, 7
    %v976 = vsel %vm973, %v974, %v975
    %vm979 = vcmask 818177
    %980 = vst.msk [vmem:[#allocation5 + $0x20] sm:$0xfe] %vm979, %v974
    %vm981 = vcmask 812032
    %982 = vst.msk [vmem:[#allocation5 + $0x40] sm:$0x3] %vm981, %v976
    %s983 = scalar_lea.vmem [#allocation4], 21
    %v984 = vld [vmem:[%s983] ss:$2 sm:$0xff]
    %s985 = scalar_lea.vmem [#allocation4], 37
    %v986 = vld [vmem:[%s985] ss:$2 sm:$0x1]
    %v989 = vrot.slane %v984, 7
    %v990 = vrot.slane %v986, 7
    %v991 = vsel %vm973, %v989, %v990
    %992 = vrot.lane.b32.xlu0 %v989, 100
    %v993 = vpop.permute.xlu0 %992
    %994 = vrot.lane.b32.xlu0 %v991, 100
    %v995 = vpop.permute.xlu0 %994
    %vm998 = vcmask 1048353
    %999 = vst.msk [vmem:[#allocation5 + $0x20] sm:$0xfe] %vm998, %v993
    %vm1000 = vcmask 588801
    %1001 = vst.msk [vmem:[#allocation5 + $0x28] sm:$0xfe] %vm1000, %v993
    %vm1002 = vcmask 1042208
    %1003 = vst.msk [vmem:[#allocation5 + $0x40] sm:$0x3] %vm1002, %v995
    %vm1004 = vcmask 582656
    %1005 = vst.msk [vmem:[#allocation5 + $0x48] sm:$0x3] %vm1004, %v995
    %s1006 = scalar_lea.vmem [#allocation4], 22
    %v1007 = vld [vmem:[%s1006] ss:$2 sm:$0xff]
    %s1008 = scalar_lea.vmem [#allocation4], 38
    %v1009 = vld [vmem:[%s1008] ss:$2 sm:$0x1]
    %v1012 = vrot.slane %v1007, 7
    %v1013 = vrot.slane %v1009, 7
    %v1014 = vsel %vm973, %v1012, %v1013
    %1015 = vrot.lane.b32.xlu0 %v1012, 72
    %v1016 = vpop.permute.xlu0 %1015
    %1017 = vrot.lane.b32.xlu0 %v1014, 72
    %v1018 = vpop.permute.xlu0 %1017
    %vm1021 = vcmask 1048129
    %1022 = vst.msk [vmem:[#allocation5 + $0x28] sm:$0xfe] %vm1021, %v1016
    %vm1023 = vcmask 359425
    %1024 = vst.msk [vmem:[#allocation5 + $0x30] sm:$0xfe] %vm1023, %v1016
    %vm1025 = vcmask 1041984
    %1026 = vst.msk [vmem:[#allocation5 + $0x48] sm:$0x3] %vm1025, %v1018
    %vm1027 = vcmask 353280
    %1028 = vst.msk [vmem:[#allocation5 + $0x50] sm:$0x3] %vm1027, %v1018
    %s1029 = scalar_lea.vmem [#allocation4], 23
    %v1030 = vld [vmem:[%s1029] ss:$2 sm:$0xff]
    %s1031 = scalar_lea.vmem [#allocation4], 39
    %v1032 = vld [vmem:[%s1031] ss:$2 sm:$0x1]
    %v1035 = vrot.slane %v1030, 7
    %v1036 = vrot.slane %v1032, 7
    %v1037 = vsel %vm973, %v1035, %v1036
    %1038 = vrot.lane.b32.xlu0 %v1035, 44
    %v1039 = vpop.permute.xlu0 %1038
    %1040 = vrot.lane.b32.xlu0 %v1037, 44
    %v1041 = vpop.permute.xlu0 %1040
    %vm1044 = vcmask 1047905
    %1045 = vst.msk [vmem:[#allocation5 + $0x30] sm:$0xfe] %vm1044, %v1039
    %vm1046 = vcmask 130049
    %1047 = vst.msk [vmem:[#allocation5 + $0x38] sm:$0xfe] %vm1046, %v1039
    %vm1048 = vcmask 1041760
    %1049 = vst.msk [vmem:[#allocation5 + $0x50] sm:$0x3] %vm1048, %v1041
    %vm1050 = vcmask 123904
    %1051 = vst.msk [vmem:[#allocation5 + $0x58] sm:$0x3] %vm1050, %v1041
    %v1052 = vld [vmem:[#allocation5] sm:$0xff]
    %v1053 = vld [vmem:[#allocation5 + $0x8] sm:$0xff]
    %v1054 = vld [vmem:[#allocation5 + $0x10] sm:$0xff]
    %v1055 = vld [vmem:[#allocation5 + $0x18] sm:$0xff]
    %v1056 = vld [vmem:[#allocation5 + $0x20] sm:$0xff]
    %v1057 = vld [vmem:[#allocation5 + $0x28] sm:$0xff]
    %v1058 = vld [vmem:[#allocation5 + $0x30] sm:$0xff]
    %v1059 = vld [vmem:[#allocation5 + $0x38] sm:$0xff]
    %v1060 = vld [vmem:[#allocation5 + $0x40] sm:$0x3]
    %v1061 = vld [vmem:[#allocation5 + $0x48] sm:$0x3]
    %v1062 = vld [vmem:[#allocation5 + $0x50] sm:$0x3]
    %v1063 = vld [vmem:[#allocation5 + $0x58] sm:$0x3]
    %v1064 = vpack.c.bf16 %v1056, %v1052
    %v1065 = vpack.c.bf16 %v1057, %v1053
    %v1066 = vpack.c.bf16 %v1058, %v1054
    %v1067 = vpack.c.bf16 %v1059, %v1055
    %v1068 = vpack.c.bf16 %v1060, %v1060
    %v1069 = vpack.c.bf16 %v1061, %v1061
    %v1070 = vpack.c.bf16 %v1062, %v1062
    %v1071 = vpack.c.bf16 %v1063, %v1063
    %v1072 = vld [vmem:[%s5] sm:$0xff]
    %v1073 = vld [vmem:[%s5 + $0x8] sm:$0xff]
    %v1074 = vld [vmem:[%s5 + $0x10] sm:$0xff]
    %v1075 = vld [vmem:[%s5 + $0x18] sm:$0xff]
    %v1076 = vld [vmem:[%s5 + $0x20] sm:$0xff]
    %v1077 = vld [vmem:[%s5 + $0x28] sm:$0xff]
    %v1078 = vld [vmem:[%s5 + $0x30] sm:$0xff]
    %v1079 = vld [vmem:[%s5 + $0x38] sm:$0xff]
    %v1080 = vld [vmem:[%s5 + $0x40] sm:$0xff]
    %v1081 = vld [vmem:[%s5 + $0x48] sm:$0xff]
    %v1082 = vld [vmem:[%s5 + $0x50] sm:$0xff]
    %v1083 = vld [vmem:[%s5 + $0x58] sm:$0xff]
    %v1084 = vld [vmem:[%s5 + $0x60] sm:$0xff]
    %v1085 = vld [vmem:[%s5 + $0x68] sm:$0xff]
    %v1086 = vld [vmem:[%s5 + $0x70] sm:$0xff]
    %v1087 = vld [vmem:[%s5 + $0x78] sm:$0xff]
    %v1088 = vld [vmem:[%s5 + $0x80] sm:$0xff]
    %v1089 = vld [vmem:[%s5 + $0x88] sm:$0xff]
    %v1090 = vld [vmem:[%s5 + $0x90] sm:$0xff]
    %v1091 = vld [vmem:[%s5 + $0x98] sm:$0xff]
    %v1092 = vld [vmem:[%s5 + $0xa0] sm:$0xff]
    %v1093 = vld [vmem:[%s5 + $0xa8] sm:$0xff]
    %v1094 = vld [vmem:[%s5 + $0xb0] sm:$0xff]
    %v1095 = vld [vmem:[%s5 + $0xb8] sm:$0xff]
    %v1096 = vld [vmem:[%s5 + $0xc0] sm:$0xff]
    %v1097 = vld [vmem:[%s5 + $0xc8] sm:$0xff]
    %v1098 = vld [vmem:[%s5 + $0xd0] sm:$0xff]
    %v1099 = vld [vmem:[%s5 + $0xd8] sm:$0xff]
    %v1100 = vld [vmem:[%s5 + $0xe0] sm:$0xff]
    %v1101 = vld [vmem:[%s5 + $0xe8] sm:$0xff]
    %v1102 = vld [vmem:[%s5 + $0xf0] sm:$0xff]
    %v1103 = vld [vmem:[%s5 + $0xf8] sm:$0xff]
    %v1104 = vld [vmem:[%s5 + $0x100] sm:$0xff]
    %v1105 = vld [vmem:[%s5 + $0x108] sm:$0xff]
    %v1106 = vld [vmem:[%s5 + $0x110] sm:$0xff]
    %v1107 = vld [vmem:[%s5 + $0x118] sm:$0xff]
    %v1108 = vld [vmem:[%s5 + $0x120] sm:$0xff]
    %v1109 = vld [vmem:[%s5 + $0x128] sm:$0xff]
    %v1110 = vld [vmem:[%s5 + $0x130] sm:$0xff]
    %v1111 = vld [vmem:[%s5 + $0x138] sm:$0xff]
    %v1112 = vld [vmem:[%s5 + $0x140] sm:$0xff]
    %v1113 = vld [vmem:[%s5 + $0x148] sm:$0xff]
    %v1114 = vld [vmem:[%s5 + $0x150] sm:$0xff]
    %v1115 = vld [vmem:[%s5 + $0x158] sm:$0xff]
    %v1116 = vld [vmem:[%s5 + $0x160] sm:$0xff]
    %v1117 = vld [vmem:[%s5 + $0x168] sm:$0xff]
    %v1118 = vld [vmem:[%s5 + $0x170] sm:$0xff]
    %v1119 = vld [vmem:[%s5 + $0x178] sm:$0xff]
    %v1120 = vld [vmem:[%s5 + $0x180] sm:$0xff]
    %v1121 = vld [vmem:[%s5 + $0x188] sm:$0xff]
    %v1122 = vld [vmem:[%s6] sm:$0x3]
    %v1124 = vlaneseq
    %v1125 = vshrl.u32 %v1124, 7
    %v1126 = vsub.s32 0, %v1125
    %v1127 = vrot.slane %v1122, %v1126
    %v1128 = vlaneseq
    %v1129 = vshrl.u32 %v1128, 7
    %v1130 = vsub.s32 1, %v1129
    %v1131 = vrot.slane %v1122, %v1130
    %v1184 = vunpack.c.l.b16 %v1072
    %v1185 = vunpack.c.h.b16 %v1072
    %v1186 = vunpack.c.l.b16 %v1073
    %v1187 = vunpack.c.h.b16 %v1073
    %v1188 = vunpack.c.l.b16 %v1074
    %v1189 = vunpack.c.h.b16 %v1074
    %v1190 = vunpack.c.l.b16 %v1075
    %v1191 = vunpack.c.h.b16 %v1075
    %v1192 = vunpack.c.l.b16 %v1076
    %v1193 = vunpack.c.h.b16 %v1076
    %v1194 = vunpack.c.l.b16 %v1077
    %v1195 = vunpack.c.h.b16 %v1077
    %v1196 = vunpack.c.l.b16 %v1078
    %v1197 = vunpack.c.h.b16 %v1078
    %v1198 = vunpack.c.l.b16 %v1079
    %v1199 = vunpack.c.h.b16 %v1079
    %v1200 = vunpack.c.l.b16 %v1080
    %v1201 = vunpack.c.h.b16 %v1080
    %v1202 = vunpack.c.l.b16 %v1081
    %v1203 = vunpack.c.h.b16 %v1081
    %v1204 = vunpack.c.l.b16 %v1082
    %v1205 = vunpack.c.h.b16 %v1082
    %v1206 = vunpack.c.l.b16 %v1083
    %v1207 = vunpack.c.h.b16 %v1083
    %v1208 = vunpack.c.l.b16 %v1084
    %v1209 = vunpack.c.h.b16 %v1084
    %v1210 = vunpack.c.l.b16 %v1085
    %v1211 = vunpack.c.h.b16 %v1085
    %v1212 = vunpack.c.l.b16 %v1086
    %v1213 = vunpack.c.h.b16 %v1086
    %v1214 = vunpack.c.l.b16 %v1087
    %v1215 = vunpack.c.h.b16 %v1087
    %v1216 = vunpack.c.l.b16 %v1088
    %v1217 = vunpack.c.h.b16 %v1088
    %v1218 = vunpack.c.l.b16 %v1089
    %v1219 = vunpack.c.h.b16 %v1089
    %v1220 = vunpack.c.l.b16 %v1090
    %v1221 = vunpack.c.h.b16 %v1090
    %v1222 = vunpack.c.l.b16 %v1091
    %v1223 = vunpack.c.h.b16 %v1091
    %v1224 = vunpack.c.l.b16 %v1092
    %v1225 = vunpack.c.h.b16 %v1092
    %v1226 = vunpack.c.l.b16 %v1093
    %v1227 = vunpack.c.h.b16 %v1093
    %v1228 = vunpack.c.l.b16 %v1094
    %v1229 = vunpack.c.h.b16 %v1094
    %v1230 = vunpack.c.l.b16 %v1095
    %v1231 = vunpack.c.h.b16 %v1095
    %v1232 = vunpack.c.l.b16 %v1096
    %v1233 = vunpack.c.h.b16 %v1096
    %v1234 = vunpack.c.l.b16 %v1097
    %v1235 = vunpack.c.h.b16 %v1097
    %v1236 = vunpack.c.l.b16 %v1098
    %v1237 = vunpack.c.h.b16 %v1098
    %v1238 = vunpack.c.l.b16 %v1099
    %v1239 = vunpack.c.h.b16 %v1099
    %v1240 = vunpack.c.l.b16 %v1100
    %v1241 = vunpack.c.h.b16 %v1100
    %v1242 = vunpack.c.l.b16 %v1101
    %v1243 = vunpack.c.h.b16 %v1101
    %v1244 = vunpack.c.l.b16 %v1102
    %v1245 = vunpack.c.h.b16 %v1102
    %v1246 = vunpack.c.l.b16 %v1103
    %v1247 = vunpack.c.h.b16 %v1103
    %v1248 = vunpack.c.l.b16 %v1104
    %v1249 = vunpack.c.h.b16 %v1104
    %v1250 = vunpack.c.l.b16 %v1105
    %v1251 = vunpack.c.h.b16 %v1105
    %v1252 = vunpack.c.l.b16 %v1106
    %v1253 = vunpack.c.h.b16 %v1106
    %v1254 = vunpack.c.l.b16 %v1107
    %v1255 = vunpack.c.h.b16 %v1107
    %v1256 = vunpack.c.l.b16 %v1108
    %v1257 = vunpack.c.h.b16 %v1108
    %v1258 = vunpack.c.l.b16 %v1109
    %v1259 = vunpack.c.h.b16 %v1109
    %v1260 = vunpack.c.l.b16 %v1110
    %v1261 = vunpack.c.h.b16 %v1110
    %v1262 = vunpack.c.l.b16 %v1111
    %v1263 = vunpack.c.h.b16 %v1111
    %v1264 = vunpack.c.l.b16 %v1112
    %v1265 = vunpack.c.h.b16 %v1112
    %v1266 = vunpack.c.l.b16 %v1113
    %v1267 = vunpack.c.h.b16 %v1113
    %v1268 = vunpack.c.l.b16 %v1114
    %v1269 = vunpack.c.h.b16 %v1114
    %v1270 = vunpack.c.l.b16 %v1115
    %v1271 = vunpack.c.h.b16 %v1115
    %v1272 = vunpack.c.l.b16 %v1116
    %v1273 = vunpack.c.h.b16 %v1116
    %v1274 = vunpack.c.l.b16 %v1117
    %v1275 = vunpack.c.h.b16 %v1117
    %v1276 = vunpack.c.l.b16 %v1118
    %v1277 = vunpack.c.h.b16 %v1118
    %v1278 = vunpack.c.l.b16 %v1119
    %v1279 = vunpack.c.h.b16 %v1119
    %v1280 = vunpack.c.l.b16 %v1120
    %v1281 = vunpack.c.h.b16 %v1120
    %v1282 = vunpack.c.l.b16 %v1121
    %v1283 = vunpack.c.h.b16 %v1121
    %v1284 = vpack.c.b16 %v1186, %v1184
    %v1285 = vpack.c.b16 %v1187, %v1185
    %v1286 = vpack.c.b16 %v1190, %v1188
    %v1287 = vpack.c.b16 %v1191, %v1189
    %v1288 = vpack.c.b16 %v1194, %v1192
    %v1289 = vpack.c.b16 %v1195, %v1193
    %v1290 = vpack.c.b16 %v1198, %v1196
    %v1291 = vpack.c.b16 %v1199, %v1197
    %v1292 = vpack.c.b16 %v1202, %v1200
    %v1293 = vpack.c.b16 %v1203, %v1201
    %v1294 = vpack.c.b16 %v1206, %v1204
    %v1295 = vpack.c.b16 %v1207, %v1205
    %v1296 = vpack.c.b16 %v1210, %v1208
    %v1297 = vpack.c.b16 %v1211, %v1209
    %v1298 = vpack.c.b16 %v1214, %v1212
    %v1299 = vpack.c.b16 %v1215, %v1213
    %v1300 = vpack.c.b16 %v1218, %v1216
    %v1301 = vpack.c.b16 %v1219, %v1217
    %v1302 = vpack.c.b16 %v1222, %v1220
    %v1303 = vpack.c.b16 %v1223, %v1221
    %v1304 = vpack.c.b16 %v1226, %v1224
    %v1305 = vpack.c.b16 %v1227, %v1225
    %v1306 = vpack.c.b16 %v1230, %v1228
    %v1307 = vpack.c.b16 %v1231, %v1229
    %v1308 = vpack.c.b16 %v1234, %v1232
    %v1309 = vpack.c.b16 %v1235, %v1233
    %v1310 = vpack.c.b16 %v1238, %v1236
    %v1311 = vpack.c.b16 %v1239, %v1237
    %v1312 = vpack.c.b16 %v1242, %v1240
    %v1313 = vpack.c.b16 %v1243, %v1241
    %v1314 = vpack.c.b16 %v1246, %v1244
    %v1315 = vpack.c.b16 %v1247, %v1245
    %v1316 = vpack.c.b16 %v1250, %v1248
    %v1317 = vpack.c.b16 %v1251, %v1249
    %v1318 = vpack.c.b16 %v1254, %v1252
    %v1319 = vpack.c.b16 %v1255, %v1253
    %v1320 = vpack.c.b16 %v1258, %v1256
    %v1321 = vpack.c.b16 %v1259, %v1257
    %v1322 = vpack.c.b16 %v1262, %v1260
    %v1323 = vpack.c.b16 %v1263, %v1261
    %v1324 = vpack.c.b16 %v1266, %v1264
    %v1325 = vpack.c.b16 %v1267, %v1265
    %v1326 = vpack.c.b16 %v1270, %v1268
    %v1327 = vpack.c.b16 %v1271, %v1269
    %v1328 = vpack.c.b16 %v1274, %v1272
    %v1329 = vpack.c.b16 %v1275, %v1273
    %v1330 = vpack.c.b16 %v1278, %v1276
    %v1331 = vpack.c.b16 %v1279, %v1277
    %v1332 = vpack.c.b16 %v1282, %v1280
    %v1333 = vpack.c.b16 %v1283, %v1281
    %v1385 = vsel %vm961, %v1067, 0
    %v1388 = vsel %vm961, %v1071, 0
    %1390 = vmatprep.subr.bf16.mxu0 %v1285
    %1391 = vmatpush1.bf16.msra.mxu0 %v1284
    %1392 = vmatprep.subr.bf16.mxu0 %v1287
    %1393 = vmatpush1.bf16.msra.mxu0 %v1286
    %1394 = vmatprep.subr.bf16.mxu0 %v1289
    %1395 = vmatpush1.bf16.msra.mxu0 %v1288
    %1396 = vmatprep.subr.bf16.mxu0 %v1291
    %1397 = vmatpush1.bf16.msra.mxu0 %v1290
    %1398 = vmatprep.subr.bf16.mxu0 %v1293
    %1399 = vmatpush1.bf16.msra.mxu0 %v1292
    %1400 = vmatprep.subr.bf16.mxu0 %v1295
    %1401 = vmatpush1.bf16.msra.mxu0 %v1294
    %1402 = vmatprep.subr.bf16.mxu0 %v1297
    %1403 = vmatpush1.bf16.msra.mxu0 %v1296
    %1404 = vmatprep.subr.bf16.mxu0 %v1299
    %1405 = vmatpush1.bf16.msra.mxu0 %v1298
    %1406 = vmatprep.subr.bf16.mxu0 %v1301
    %1407 = vmatpush1.bf16.msra.mxu0 %v1300
    %1408 = vmatprep.subr.bf16.mxu0 %v1303
    %1409 = vmatpush1.bf16.msra.mxu0 %v1302
    %1410 = vmatprep.subr.bf16.mxu0 %v1305
    %1411 = vmatpush1.bf16.msra.mxu0 %v1304
    %1412 = vmatprep.subr.bf16.mxu0 %v1307
    %1413 = vmatpush1.bf16.msra.mxu0 %v1306
    %1414 = vmatprep.subr.bf16.mxu0 %v1309
    %1415 = vmatpush1.bf16.msra.mxu0 %v1308
    %1416 = vmatprep.subr.bf16.mxu0 %v1311
    %1417 = vmatpush1.bf16.msra.mxu0 %v1310
    %1418 = vmatprep.subr.bf16.mxu0 %v1313
    %1419 = vmatpush1.bf16.msra.mxu0 %v1312
    %1420 = vmatprep.subr.bf16.mxu0 %v1315
    %1421 = vmatpush1.bf16.msra.mxu0 %v1314
    %1422 = vmatprep.mubr.bf16.mxu0 %v1065
    %1423 = vmatmul.mubr.bf16.gmra.mrb[0].mxu0 %v1064
    %v1424 = vpop.f32.mrb[0].mxu0
    %v1425 = vadd.f32 %v1127, %v1424
    %v1426 = vpop.f32.mrb[0].mxu0
    %v1427 = vadd.f32 %v1131, %v1426
    %v1428 = vpop.f32.mrb[0].mxu0
    %v1429 = vadd.f32 %v1127, %v1428
    %v1430 = vpop.f32.mrb[0].mxu0
    %v1431 = vadd.f32 %v1131, %v1430
    %1432 = vmatprep.mubr.bf16.mxu0 %v1069
    %1433 = vmatmul.mubr.bf16.gmra.mrb[0].mxu0 %v1068
    %v1434 = vpop.f32.mrb[0].mxu0
    %v1435 = vadd.f32 %v1127, %v1434
    %v1436 = vpop.f32.mrb[0].mxu0
    %v1437 = vadd.f32 %v1131, %v1436
    %v1438 = vpop.f32.mrb[0].mxu0
    %v1439 = vpop.f32.mrb[0].mxu0
    %1440 = vdwg.mxu0
    %1441 = vmatprep.subr.bf16.mxu0 %v1317
    %1442 = vmatpush1.bf16.msra.mxu0 %v1316
    %1443 = vmatprep.subr.bf16.mxu0 %v1319
    %1444 = vmatpush1.bf16.msra.mxu0 %v1318
    %1445 = vmatprep.subr.bf16.mxu0 %v1321
    %1446 = vmatpush1.bf16.msra.mxu0 %v1320
    %1447 = vmatprep.subr.bf16.mxu0 %v1323
    %1448 = vmatpush1.bf16.msra.mxu0 %v1322
    %1449 = vmatprep.subr.bf16.mxu0 %v1325
    %1450 = vmatpush1.bf16.msra.mxu0 %v1324
    %1451 = vmatprep.subr.bf16.mxu0 %v1327
    %1452 = vmatpush1.bf16.msra.mxu0 %v1326
    %1453 = vmatprep.subr.bf16.mxu0 %v1329
    %1454 = vmatpush1.bf16.msra.mxu0 %v1328
    %1455 = vmatprep.subr.bf16.mxu0 %v1331
    %1456 = vmatpush1.bf16.msra.mxu0 %v1330
    %1457 = vmatprep.subr.bf16.mxu0 %v1333
    %1458 = vmatpush1.bf16.msra.mxu0 %v1332
    %1459 = vmatprep.subr.bf16.mxu0 0
    %1460 = vmatpush1.bf16.msra.mxu0 0
    %1461 = vmatprep.subr.bf16.mxu0 0
    %1462 = vmatpush1.bf16.msra.mxu0 0
    %1463 = vmatprep.subr.bf16.mxu0 0
    %1464 = vmatpush1.bf16.msra.mxu0 0
    %1465 = vmatprep.subr.bf16.mxu0 0
    %1466 = vmatpush1.bf16.msra.mxu0 0
    %1467 = vmatprep.subr.bf16.mxu0 0
    %1468 = vmatpush1.bf16.msra.mxu0 0
    %1469 = vmatprep.subr.bf16.mxu0 0
    %1470 = vmatpush1.bf16.msra.mxu0 0
    %1471 = vmatprep.subr.bf16.mxu0 0
    %1472 = vmatpush1.bf16.msra.mxu0 0
    %1473 = vmatprep.mubr.bf16.mxu0 %v1385
    %1474 = vmatmul.mubr.bf16.gmra.mrb[0].mxu0 %v1066
    %v1475 = vpop.f32.mrb[0].mxu0
    %v1476 = vadd.f32 %v1425, %v1475
    %v1477 = vpop.f32.mrb[0].mxu0
    %v1478 = vadd.f32 %v1427, %v1477
    %v1479 = vpop.f32.mrb[0].mxu0
    %v1480 = vadd.f32 %v1429, %v1479
    %v1481 = vpop.f32.mrb[0].mxu0
    %v1482 = vadd.f32 %v1431, %v1481
    %1483 = vmatprep.mubr.bf16.mxu0 %v1388
    %1484 = vmatmul.mubr.bf16.gmra.mrb[0].mxu0 %v1070
    %v1485 = vpop.f32.mrb[0].mxu0
    %v1486 = vadd.f32 %v1435, %v1485
    %v1487 = vpop.f32.mrb[0].mxu0
    %v1488 = vadd.f32 %v1437, %v1487
    %v1489 = vpop.f32.mrb[0].mxu0
    %v1490 = vpop.f32.mrb[0].mxu0
    %1491 = vdwg.mxu0
    %v1492 = vmax.f32 %v1476, 0.0
    %v1493 = vmax.f32 %v1478, 0.0
    %v1494 = vmax.f32 %v1480, 0.0
    %v1495 = vmax.f32 %v1482, 0.0
    %v1496 = vmax.f32 %v1486, 0.0
    %v1497 = vmax.f32 %v1488, 0.0
    %1498 = vst [vmem:[#allocation6] sm:$0xff] %v1492
    %1499 = vst.msk [vmem:[#allocation6 + $0x8] sm:$0xff] %vm922, %v1493
    %1500 = vst [vmem:[#allocation6 + $0x10] sm:$0xff] %v1494
    %1501 = vst.msk [vmem:[#allocation6 + $0x18] sm:$0xff] %vm922, %v1495
    %1502 = vst [vmem:[#allocation6 + $0x20] sm:$0x3] %v1496
    %1503 = vst.msk [vmem:[#allocation6 + $0x28] sm:$0x3] %vm1004, %v1497
    %v1504 = vld [vmem:[#allocation6] sm:$0xff]
    %v1505 = vld [vmem:[#allocation6 + $0x8] sm:$0xff]
    %v1506 = vld [vmem:[#allocation6 + $0x10] sm:$0x1]
    %v1507 = vld [vmem:[#allocation6 + $0x18] sm:$0x1]
    %v1508 = vld [vmem:[%s7] sm:$0xff]
    %v1509 = vld [vmem:[%s7 + $0x8] sm:$0xff]
    %v1510 = vld [vmem:[%s7 + $0x10] sm:$0x1]
    %v1511 = vld [vmem:[%s7 + $0x18] sm:$0x1]
    %v1512 = vmul.f32 %v1504, %v1508
    %v1513 = vmul.f32 %v1505, %v1509
    %v1514 = vmul.f32 %v1506, %v1510
    %v1515 = vmul.f32 %v1507, %v1511
    %v1516 = vsel %vm922, %v1513, 0.0
    %v1517 = vadd.f32 %v1512, %v1516
    %1518 = vadd.xlane.f32.xlu0 %v1517
    %v1519 = vpop.xlane.xlu0 %1518
    %v1520 = vsel %vm973, %v1514, 0.0
    %v1521 = vsel %vm926, %v1515, 0.0
    %v1522 = vadd.f32 %v1520, %v1521
    %1523 = vadd.xlane.f32.xlu0 %v1522
    %v1524 = vpop.xlane.xlu0 %1523
    %s1525 = scalar_lea.vmem %s7, 32
    %v1526 = vld [vmem:[%s1525] sm:$0xff]
    %v1527 = vld [vmem:[%s1525 + $0x8] sm:$0xff]
    %v1528 = vld [vmem:[%s1525 + $0x10] sm:$0x1]
    %v1529 = vld [vmem:[%s1525 + $0x18] sm:$0x1]
    %v1530 = vmul.f32 %v1504, %v1526
    %v1531 = vmul.f32 %v1505, %v1527
    %v1532 = vmul.f32 %v1506, %v1528
    %v1533 = vmul.f32 %v1507, %v1529
    %v1534 = vsel %vm922, %v1531, 0.0
    %v1535 = vadd.f32 %v1530, %v1534
    %1536 = vadd.xlane.f32.xlu0 %v1535
    %v1537 = vpop.xlane.xlu0 %1536
    %v1538 = vsel %vm973, %v1532, 0.0
    %v1539 = vsel %vm926, %v1533, 0.0
    %v1540 = vadd.f32 %v1538, %v1539
    %1541 = vadd.xlane.f32.xlu0 %v1540
    %v1542 = vpop.xlane.xlu0 %1541
    %vm1543 = vcmask 7168
    %v1544 = vsel %vm1543, %v1519, %v1537
    %v1545 = vsel %vm1543, %v1524, %v1542
    %vm1546 = vcmask 15360
    %v1547 = vsel %vm1546, %v1544, 0.0
    %vm1548 = vcmask 8192
    %v1549 = vsel %vm1548, %v1545, 0.0
    %v1550 = vadd.f32 %v1547, %v1549
    %v1551 = vrot.slane %v1550, 4
    %v1552 = vadd.f32 %v1550, %v1551
    %v1553 = vrot.slane %v1552, 2
    %v1554 = vadd.f32 %v1552, %v1553
    %v1555 = vrot.slane %v1554, 1
    %v1556 = vadd.f32 %v1554, %v1555
    %v1557 = vld [vmem:[#allocation6 + $0x10] sm:$0xfe]
    %v1558 = vld [vmem:[#allocation6 + $0x18] sm:$0xfe]
    %v1559 = vld [vmem:[#allocation6 + $0x20] sm:$0x3]
    %v1560 = vld [vmem:[#allocation6 + $0x28] sm:$0x3]
    %v1565 = vrot.slane %v1508, 7
    %v1566 = vrot.slane %v1509, 7
    %v1567 = vrot.slane %v1510, 7
    %v1568 = vsel %vm973, %v1565, %v1567
    %v1569 = vrot.slane %v1511, 7
    %v1570 = vsel %vm973, %v1566, %v1569
    %v1575 = vmul.f32 %v1557, %v1565
    %v1576 = vmul.f32 %v1558, %v1566
    %v1577 = vmul.f32 %v1559, %v1568
    %v1578 = vmul.f32 %v1560, %v1570
    %vm1579 = vcmask 1047553
    %v1580 = vsel %vm1579, %v1575, 0.0
    %v1581 = vsel %vm1000, %v1576, 0.0
    %v1582 = vadd.f32 %v1580, %v1581
    %1583 = vadd.xlane.f32.xlu0 %v1582
    %v1584 = vpop.xlane.xlu0 %1583
    %vm1585 = vcmask 1041408
    %v1586 = vsel %vm1585, %v1577, 0.0
    %v1587 = vsel %vm1004, %v1578, 0.0
    %v1588 = vadd.f32 %v1586, %v1587
    %1589 = vadd.xlane.f32.xlu0 %v1588
    %v1590 = vpop.xlane.xlu0 %1589
    %v1595 = vrot.slane %v1526, 7
    %v1596 = vrot.slane %v1527, 7
    %v1597 = vrot.slane %v1528, 7
    %v1598 = vsel %vm973, %v1595, %v1597
    %v1599 = vrot.slane %v1529, 7
    %v1600 = vsel %vm973, %v1596, %v1599
    %v1605 = vmul.f32 %v1557, %v1595
    %v1606 = vmul.f32 %v1558, %v1596
    %v1607 = vmul.f32 %v1559, %v1598
    %v1608 = vmul.f32 %v1560, %v1600
    %v1609 = vsel %vm1579, %v1605, 0.0
    %v1610 = vsel %vm1000, %v1606, 0.0
    %v1611 = vadd.f32 %v1609, %v1610
    %1612 = vadd.xlane.f32.xlu0 %v1611
    %v1613 = vpop.xlane.xlu0 %1612
    %v1614 = vsel %vm1585, %v1607, 0.0
    %v1615 = vsel %vm1004, %v1608, 0.0
    %v1616 = vadd.f32 %v1614, %v1615
    %1617 = vadd.xlane.f32.xlu0 %v1616
    %v1618 = vpop.xlane.xlu0 %1617
    %v1619 = vsel %vm1543, %v1584, %v1613
    %v1620 = vsel %vm1543, %v1590, %v1618
    %vm1623 = vcmask 1046528
    %v1624 = vrot.slane %v1619, 1
    %v1625 = vrot.slane %v1620, 1
    %v1626 = vsel %vm1623, %v1624, %v1625
    %v1629 = vsel %vm1546, %v1626, 0.0
    %v1630 = vsel %vm1548, %v1625, 0.0
    %v1631 = vadd.f32 %v1629, %v1630
    %v1632 = vrot.slane %v1631, 4
    %v1633 = vadd.f32 %v1631, %v1632
    %v1634 = vrot.slane %v1633, 2
    %v1635 = vadd.f32 %v1633, %v1634
    %v1636 = vrot.slane %v1635, 1
    %v1637 = vadd.f32 %v1635, %v1636
    %v1638 = vsel %vm973, %v1556, %v1637
    %v1639 = vld [vmem:[%s8] sm:$0x1]
    %v1641 = vlaneseq
    %v1642 = vshrl.u32 %v1641, 7
    %v1643 = vsub.s32 0, %v1642
    %v1644 = vrot.slane %v1639, %v1643
    %v1646 = vadd.f32 %v1638, %v1644
    %vm1647 = vcmask 9216
    %1648 = vst.msk [vmem:[#allocation7] sm:$0x3] %vm1647, %v1646
    // Predicated region
    $region38: #{mynet1_forward.1} parent=1 // pred_check
      _
    $region39: #{mynet1_forward.1} parent=1 // pred_check_branch
      %1650 = sbr.rel (0) target = $region41
    $region40: #{mynet1_forward.1} parent=1 // pred_region
      %s1652 = ssub.s32 32, 32
      %1653 = vsyncadd [#allocation8], %s1652
      %s1655 = sshll.u32 [#allocation7], 4
      %s1656 = int_to_ptr.vmem [resolvable:$true] %s1655
      %1658 = dma.vmem_to_hbm [thread:$0]  %s1656, 32, %s9, [#allocation8]
    $region41: #{mynet1_forward.1} parent=1 // pred_fallthru
      _
    // Predicated region
    $region42: #{mynet1_forward.1} parent=1 // pred_check
      _
    $region43: #{mynet1_forward.1} parent=1 // pred_check_branch
      %1660 = sbr.rel (0) target = $region45
    $region44: #{mynet1_forward.1} parent=1 // pred_region
      %1661 = dma.done [#allocation8], 32
    $region45: #{mynet1_forward.1} parent=1 // pred_fallthru
      _
    %1662 = vsyncpa [#allocation8], 1

</llo_original>
